<compile_context>
chip_gen: v5e
topology: v5e:2x2
jax: 0.10.0
libtpu: 0.0.40
codegen_flags: <defaults>
</compile_context>

<pallas_src>
import functools

import numpy as np
import jax
import jax.numpy as jnp
from jax import lax
from jax.experimental import pallas as pl
from jax.experimental.pallas import tpu as pltpu


# ----------------------------- Pallas kernel -----------------------------

def _round_up(x, m):
    return (x + m - 1) // m * m


def _cdist_kernel(sq_i_ref, sq_j_ref, xi_ref, xj_ref, o_ref, acc_ref, *, scale):
    """One (tm, tn) tile of the distance matrix; Gram accumulated over K tiles."""
    k = pl.program_id(2)

    @pl.when(k == 0)
    def _():
        acc_ref[...] = jnp.zeros_like(acc_ref)

    # Contract dim 1 of both operands directly (no x.T materialization, MXU).
    acc_ref[...] += lax.dot_general(
        xi_ref[...], xj_ref[...],
        dimension_numbers=(((1,), (1,)), ((), ())),
        preferred_element_type=jnp.float32,
    )

    @pl.when(k == pl.num_programs(2) - 1)
    def _():
        d2 = sq_i_ref[...] + sq_j_ref[...] - 2.0 * acc_ref[...]
        d = jnp.sqrt(jnp.maximum(d2, 0.0))
        o_ref[...] = (d * scale).astype(o_ref.dtype)


def pallas_cdist(x, scale=1.0, *, bm=256, tk=512):
    """Pairwise Euclidean distance matrix of x.reshape(B, -1), times `scale`."""
    x_flat = jnp.asarray(x, dtype=jnp.float32).reshape(x.shape[0], -1)
    B, D = x_flat.shape

    # Pad batch to the 128-lane granule (dense MXU operands, unmasked stores).
    B_pad = max(_round_up(B, 128), 128)
    tm = min(bm, B_pad)
    tn = min(bm, B_pad)

    # K tile: 512 keeps the double-buffered input tiles small while amortizing
    # per-step overhead; small D collapses to a single lane-padded tile.
    if D <= tk:
        tk_eff = _round_up(max(D, 1), 128)
        D_pad = tk_eff
    else:
        tk_eff = tk
        D_pad = _round_up(D, tk)

    x_pad = jnp.zeros((B_pad, D_pad), jnp.float32).at[:B, :D].set(x_flat)

    # Squared row norms: one cheap fused pass, streamed into the kernel as
    # (tm, 1) / (1, tn) blocks (keeps the epilogue free of reductions).
    sq = jnp.sum(x_pad * x_pad, axis=1)
    sq_row = sq.reshape(B_pad, 1)
    sq_col = sq.reshape(1, B_pad)

    grid = (B_pad // tm, B_pad // tn, D_pad // tk_eff)

    out = pl.pallas_call(
        functools.partial(_cdist_kernel, scale=float(scale)),
        out_shape=jax.ShapeDtypeStruct((B_pad, B_pad), jnp.float32),
        grid=grid,
        in_specs=[
            pl.BlockSpec((tm, 1), lambda i, j, k: (i, 0)),
            pl.BlockSpec((1, tn), lambda i, j, k: (0, j)),
            pl.BlockSpec((tm, tk_eff), lambda i, j, k: (i, k)),
            pl.BlockSpec((tn, tk_eff), lambda i, j, k: (j, k)),
        ],
        out_specs=pl.BlockSpec((tm, tn), lambda i, j, k: (i, j)),
        scratch_shapes=[pltpu.VMEM((tm, tn), jnp.float32)],
        compiler_params=pltpu.CompilerParams(
            dimension_semantics=("parallel", "parallel", "arbitrary")),
    )(sq_row, sq_col, x_pad, x_pad)
    return out[:B, :B]


# One jit'd function producing both distance matrices so they are dispatched
# together and transferred to the host with a single device_get.
@functools.partial(
    jax.jit,
    static_argnames=("input_scale", "feature_scale", "normalize_input_by_max"))
def _distance_matrices(input_space, feature_space, input_scale, feature_scale,
                       normalize_input_by_max):
    d_in = pallas_cdist(input_space, scale=input_scale)
    if normalize_input_by_max:
        d_in = d_in / jnp.max(d_in)
    d_feat = pallas_cdist(feature_space, scale=feature_scale)
    return d_in, d_feat


# ----------------- persistent homology (host / numpy glue) ----------------
# TODO(synk): union-find + stable-argsort persistence pairing is sequential,
# data-dependent control flow with no clean Pallas equivalent; the reference
# runs it on CPU with numpy as well (.detach().cpu().numpy()).

class UnionFind:
    def __init__(self, n_vertices):
        self._parent = np.arange(n_vertices, dtype=int)

    def find(self, u):
        if self._parent[u] == u:
            return u
        self._parent[u] = self.find(self._parent[u])
        return self._parent[u]

    def merge(self, u, v):
        if u != v:
            self._parent[self.find(u)] = self.find(v)


def persistence_pairs_0d(matrix):
    """0-dim persistence pairs (MST edges) of a distance matrix (numpy)."""
    n_vertices = matrix.shape[0]
    uf = UnionFind(n_vertices)
    # k=1: diagonal "edges" are always skipped by union-find (u == v => same
    # component), so excluding them changes nothing but avoids wasted sort
    # work and any spurious near-zero diagonal entries in the stable prefix.
    triu_indices = np.triu_indices(n_vertices, k=1)
    edge_weights = matrix[triu_indices]
    edge_indices = np.argsort(edge_weights, kind="stable")
    persistence_pairs = []
    for edge_index in edge_indices:
        u = triu_indices[0][edge_index]
        v = triu_indices[1][edge_index]
        younger = uf.find(u)
        older = uf.find(v)
        if younger == older:
            continue
        elif younger > older:
            uf.merge(v, u)
        else:
            uf.merge(u, v)
        persistence_pairs.append((u, v) if u < v else (v, u))
    return np.array(persistence_pairs, dtype=np.int32)


# ------------------------- topological loss (glue) -------------------------

def compute_topological_loss(input_space, feature_space, norm_constant=1.0,
                             match_edges=None):
    assert match_edges is None  # default configuration of the module
    dims = input_space.shape
    latent_norm = 1.0            # Parameter(ones(1)) in the reference

    if len(dims) == 4:
        _, ch, h, w = dims
        max_distance = (2 ** 2 * ch * h * w) ** 0.5
        input_scale = 1.0 / max_distance
        normalize_by_max = False
    else:
        input_scale = 1.0
        normalize_by_max = True   # divide by the matrix max post-kernel

    feature_scale = 1.0 / (latent_norm * float(norm_constant))

    d_in, d_feat = _distance_matrices(
        jnp.asarray(input_space), jnp.asarray(feature_space),
        input_scale, feature_scale, normalize_by_max)

    # Single device->host round trip for both matrices, then host union-find.
    d_in_np, d_feat_np = jax.device_get((d_in, d_feat))
    pairs1 = persistence_pairs_0d(d_in_np)
    pairs2 = persistence_pairs_0d(d_feat_np)

    sig1 = d_in[pairs1[:, 0], pairs1[:, 1]]
    sig2 = d_feat[pairs2[:, 0], pairs2[:, 1]]
    topo_error = jnp.sum((sig1 - sig2) ** 2)

    batch_size = dims[0]
    return topo_error / float(batch_size)


class PersistentHomologyLoss:
    def __init__(self, add_trainable_norm_factor_for_embeddings_distmat=False,
                 norm_factor_init_value=1.0, enable_since_epoch=0,
                 match_edges=None):
        # deterministic "parameter" init (scalar norm constant)
        self.norm_constant = float(norm_factor_init_value)
        self.enable_since_epoch = enable_since_epoch
        self.match_edges = match_edges

    def __call__(self, input_tensors, layer_output, embeddings, epoch,
                 *args, **kwargs):
        if epoch < self.enable_since_epoch:
            return 0.0
        space = input_tensors if layer_output is None else layer_output
        return compute_topological_loss(space, embeddings,
                                        norm_constant=self.norm_constant,
                                        match_edges=self.match_edges)


# ---------------------------------- main -----------------------------------

if __name__ == "__main__":
    key = jax.random.PRNGKey(0)
    k1, k2 = jax.random.split(key)

    B, C, H, W = 8, 4, 16, 16
    HID = 32
    x = jax.random.normal(k1, (B, C, H, W), dtype=jnp.float32)       # input space (NCHW)
    embeddings = jax.random.normal(k2, (B, HID), dtype=jnp.float32)  # feature space

    loss_fn = PersistentHomologyLoss()
    loss = loss_fn(x, None, embeddings, epoch=0)
    loss = jax.block_until_ready(loss)
    assert jnp.isfinite(loss)
    print("KERNEL_OK")
</pallas_src>

<mosaic_0001>
module attributes {stable_mosaic.version = 11 : i64} {
  func.func @_cdist_kernel(%arg0: i32, %arg1: i32, %arg2: i32, %arg3: memref<128x1xf32, #tpu.memory_space<vmem>>, %arg4: memref<1x128xf32, #tpu.memory_space<vmem>>, %arg5: memref<128x512xf32, #tpu.memory_space<vmem>>, %arg6: memref<128x512xf32, #tpu.memory_space<vmem>>, %arg7: memref<128x128xf32, #tpu.memory_space<vmem>>, %arg8: memref<128x128xf32, #tpu.memory_space<vmem>>) attributes {dimension_semantics = [#tpu.dimension_semantics<parallel>, #tpu.dimension_semantics<parallel>, #tpu.dimension_semantics<arbitrary>], iteration_bounds = array<i64: 1, 1, 2>, scalar_prefetch = 0 : i64, scratch_operands = 1 : i64, tpu.core_type = #tpu.core_type<tc>, window_params = [{transform_indices = @transform_0, window_bounds = array<i64: 128, 1>}, {transform_indices = @transform_1, window_bounds = array<i64: 1, 128>}, {transform_indices = @transform_2, window_bounds = array<i64: 128, 512>}, {transform_indices = @transform_3, window_bounds = array<i64: 128, 512>}, {transform_indices = @transform_4, window_bounds = array<i64: 128, 128>}]} {
    %c0_i32 = arith.constant 0 : i32
    %0 = arith.cmpi eq, %arg2, %c0_i32 : i32
    %1 = arith.extui %0 : i1 to i32
    %c0_i32_0 = arith.constant 0 : i32
    %2 = arith.cmpi ne, %1, %c0_i32_0 : i32
    scf.if %2 {
      %cst_9 = arith.constant 0.000000e+00 : f32
      %12 = vector.broadcast %cst_9 : f32 to vector<128x128xf32>
      %c0_10 = arith.constant 0 : index
      %c0_11 = arith.constant 0 : index
      %13 = vector.load %arg8[%c0_10, %c0_11] : memref<128x128xf32, #tpu.memory_space<vmem>>, vector<128x128xf32>
      tpu.vector_store %arg8[%c0_10, %c0_11], %12 {strides = array<i32>} : memref<128x128xf32, #tpu.memory_space<vmem>>, vector<128x128xf32>,
    } else {
    }
    %c0 = arith.constant 0 : index
    %c0_1 = arith.constant 0 : index
    %3 = vector.load %arg8[%c0, %c0_1] : memref<128x128xf32, #tpu.memory_space<vmem>>, vector<128x128xf32>
    %c0_2 = arith.constant 0 : index
    %c0_3 = arith.constant 0 : index
    %4 = vector.load %arg5[%c0_2, %c0_3] : memref<128x512xf32, #tpu.memory_space<vmem>>, vector<128x512xf32>
    %c0_4 = arith.constant 0 : index
    %c0_5 = arith.constant 0 : index
    %5 = vector.load %arg6[%c0_4, %c0_5] : memref<128x512xf32, #tpu.memory_space<vmem>>, vector<128x512xf32>
    %cst = arith.constant dense<0.000000e+00> : vector<128x128xf32>
    %6 = tpu.matmul %4, %5, %cst {dimension_numbers = #tpu.dot_dimension_numbers<[1], [1], [0], [0], [0, 0, 1, 0], [], []>} : vector<128x512xf32>, vector<128x512xf32>, vector<128x128xf32> -> vector<128x128xf32>
    %7 = arith.addf %3, %6 : vector<128x128xf32>
    %c0_6 = arith.constant 0 : index
    %c0_7 = arith.constant 0 : index
    %8 = vector.load %arg8[%c0_6, %c0_7] : memref<128x128xf32, #tpu.memory_space<vmem>>, vector<128x128xf32>
    tpu.vector_store %arg8[%c0_6, %c0_7], %7 {strides = array<i32>} : memref<128x128xf32, #tpu.memory_space<vmem>>, vector<128x128xf32>,
    %c1_i32 = arith.constant 1 : i32
    %9 = arith.cmpi eq, %arg2, %c1_i32 : i32
    %10 = arith.extui %9 : i1 to i32
    %c0_i32_8 = arith.constant 0 : i32
    %11 = arith.cmpi ne, %10, %c0_i32_8 : i32
    scf.if %11 {
      %c0_9 = arith.constant 0 : index
      %c0_10 = arith.constant 0 : index
      %12 = vector.load %arg3[%c0_9, %c0_10] : memref<128x1xf32, #tpu.memory_space<vmem>>, vector<128x1xf32>
      %c0_11 = arith.constant 0 : index
      %c0_12 = arith.constant 0 : index
      %13 = vector.load %arg4[%c0_11, %c0_12] : memref<1x128xf32, #tpu.memory_space<vmem>>, vector<1x128xf32>
      %14 = vector.broadcast %12 : vector<128x1xf32> to vector<128x128xf32>
      %15 = vector.broadcast %13 : vector<1x128xf32> to vector<128x128xf32>
      %16 = arith.addf %14, %15 : vector<128x128xf32>
      %c0_13 = arith.constant 0 : index
      %c0_14 = arith.constant 0 : index
      %17 = vector.load %arg8[%c0_13, %c0_14] : memref<128x128xf32, #tpu.memory_space<vmem>>, vector<128x128xf32>
      %cst_15 = arith.constant 2.000000e+00 : f32
      %18 = vector.broadcast %cst_15 : f32 to vector<128x128xf32>
      %19 = arith.mulf %18, %17 : vector<128x128xf32>
      %20 = arith.subf %16, %19 : vector<128x128xf32>
      %cst_16 = arith.constant 0.000000e+00 : f32
      %21 = vector.broadcast %cst_16 : f32 to vector<128x128xf32>
      %22 = arith.maximumf %20, %21 : vector<128x128xf32>
      %23 = math.sqrt %22 : vector<128x128xf32>
      %cst_17 = arith.constant 1.562500e-02 : f32
      %24 = vector.broadcast %cst_17 : f32 to vector<128x128xf32>
      %25 = arith.mulf %23, %24 : vector<128x128xf32>
      %c0_18 = arith.constant 0 : index
      %c0_19 = arith.constant 0 : index
      %26 = vector.load %arg7[%c0_18, %c0_19] : memref<128x128xf32, #tpu.memory_space<vmem>>, vector<128x128xf32>
      tpu.vector_store %arg7[%c0_18, %c0_19], %25 {strides = array<i32>} : memref<128x128xf32, #tpu.memory_space<vmem>>, vector<128x128xf32>,
    } else {
    }
    return
  }
  func.func @transform_0(%arg0: i32, %arg1: i32, %arg2: i32) -> (i32, i32) {
    %c0_i32 = arith.constant 0 : i32
    %c0_i32_0 = arith.constant 0 : i32
    return %arg0, %c0_i32 : i32, i32
  }
  func.func @transform_1(%arg0: i32, %arg1: i32, %arg2: i32) -> (i32, i32) {
    %c0_i32 = arith.constant 0 : i32
    %c0_i32_0 = arith.constant 0 : i32
    return %c0_i32, %arg1 : i32, i32
  }
  func.func @transform_2(%arg0: i32, %arg1: i32, %arg2: i32) -> (i32, i32) {
    %c0_i32 = arith.constant 0 : i32
    return %arg0, %arg2 : i32, i32
  }
  func.func @transform_3(%arg0: i32, %arg1: i32, %arg2: i32) -> (i32, i32) {
    %c0_i32 = arith.constant 0 : i32
    return %arg1, %arg2 : i32, i32
  }
  func.func @transform_4(%arg0: i32, %arg1: i32, %arg2: i32) -> (i32, i32) {
    %c0_i32 = arith.constant 0 : i32
    return %arg0, %arg1 : i32, i32
  }
}

module attributes {stable_mosaic.version = 11 : i64} {
  func.func @_cdist_kernel(%arg0: i32, %arg1: i32, %arg2: i32, %arg3: memref<128x1xf32, #tpu.memory_space<vmem>>, %arg4: memref<1x128xf32, #tpu.memory_space<vmem>>, %arg5: memref<128x128xf32, #tpu.memory_space<vmem>>, %arg6: memref<128x128xf32, #tpu.memory_space<vmem>>, %arg7: memref<128x128xf32, #tpu.memory_space<vmem>>, %arg8: memref<128x128xf32, #tpu.memory_space<vmem>>) attributes {dimension_semantics = [#tpu.dimension_semantics<parallel>, #tpu.dimension_semantics<parallel>, #tpu.dimension_semantics<arbitrary>], iteration_bounds = array<i64: 1, 1, 1>, scalar_prefetch = 0 : i64, scratch_operands = 1 : i64, tpu.core_type = #tpu.core_type<tc>, window_params = [{transform_indices = @transform_0, window_bounds = array<i64: 128, 1>}, {transform_indices = @transform_1, window_bounds = array<i64: 1, 128>}, {transform_indices = @transform_2, window_bounds = array<i64: 128, 128>}, {transform_indices = @transform_3, window_bounds = array<i64: 128, 128>}, {transform_indices = @transform_4, window_bounds = array<i64: 128, 128>}]} {
    %c0_i32 = arith.constant 0 : i32
    %0 = arith.cmpi eq, %arg2, %c0_i32 : i32
    %1 = arith.extui %0 : i1 to i32
    %c0_i32_0 = arith.constant 0 : i32
    %2 = arith.cmpi ne, %1, %c0_i32_0 : i32
    scf.if %2 {
      %cst_10 = arith.constant 0.000000e+00 : f32
      %12 = vector.broadcast %cst_10 : f32 to vector<128x128xf32>
      %c0_11 = arith.constant 0 : index
      %c0_12 = arith.constant 0 : index
      %13 = vector.load %arg8[%c0_11, %c0_12] : memref<128x128xf32, #tpu.memory_space<vmem>>, vector<128x128xf32>
      tpu.vector_store %arg8[%c0_11, %c0_12], %12 {strides = array<i32>} : memref<128x128xf32, #tpu.memory_space<vmem>>, vector<128x128xf32>,
    } else {
    }
    %c0 = arith.constant 0 : index
    %c0_1 = arith.constant 0 : index
    %3 = vector.load %arg8[%c0, %c0_1] : memref<128x128xf32, #tpu.memory_space<vmem>>, vector<128x128xf32>
    %c0_2 = arith.constant 0 : index
    %c0_3 = arith.constant 0 : index
    %4 = vector.load %arg5[%c0_2, %c0_3] : memref<128x128xf32, #tpu.memory_space<vmem>>, vector<128x128xf32>
    %c0_4 = arith.constant 0 : index
    %c0_5 = arith.constant 0 : index
    %5 = vector.load %arg6[%c0_4, %c0_5] : memref<128x128xf32, #tpu.memory_space<vmem>>, vector<128x128xf32>
    %cst = arith.constant dense<0.000000e+00> : vector<128x128xf32>
    %6 = tpu.matmul %4, %5, %cst {dimension_numbers = #tpu.dot_dimension_numbers<[1], [1], [0], [0], [0, 0, 1, 0], [], []>} : vector<128x128xf32>, vector<128x128xf32>, vector<128x128xf32> -> vector<128x128xf32>
    %7 = arith.addf %3, %6 : vector<128x128xf32>
    %c0_6 = arith.constant 0 : index
    %c0_7 = arith.constant 0 : index
    %8 = vector.load %arg8[%c0_6, %c0_7] : memref<128x128xf32, #tpu.memory_space<vmem>>, vector<128x128xf32>
    tpu.vector_store %arg8[%c0_6, %c0_7], %7 {strides = array<i32>} : memref<128x128xf32, #tpu.memory_space<vmem>>, vector<128x128xf32>,
    %c0_i32_8 = arith.constant 0 : i32
    %9 = arith.cmpi eq, %arg2, %c0_i32_8 : i32
    %10 = arith.extui %9 : i1 to i32
    %c0_i32_9 = arith.constant 0 : i32
    %11 = arith.cmpi ne, %10, %c0_i32_9 : i32
    scf.if %11 {
      %c0_10 = arith.constant 0 : index
      %c0_11 = arith.constant 0 : index
      %12 = vector.load %arg3[%c0_10, %c0_11] : memref<128x1xf32, #tpu.memory_space<vmem>>, vector<128x1xf32>
      %c0_12 = arith.constant 0 : index
      %c0_13 = arith.constant 0 : index
      %13 = vector.load %arg4[%c0_12, %c0_13] : memref<1x128xf32, #tpu.memory_space<vmem>>, vector<1x128xf32>
      %14 = vector.broadcast %12 : vector<128x1xf32> to vector<128x128xf32>
      %15 = vector.broadcast %13 : vector<1x128xf32> to vector<128x128xf32>
      %16 = arith.addf %14, %15 : vector<128x128xf32>
      %c0_14 = arith.constant 0 : index
      %c0_15 = arith.constant 0 : index
      %17 = vector.load %arg8[%c0_14, %c0_15] : memref<128x128xf32, #tpu.memory_space<vmem>>, vector<128x128xf32>
      %cst_16 = arith.constant 2.000000e+00 : f32
      %18 = vector.broadcast %cst_16 : f32 to vector<128x128xf32>
      %19 = arith.mulf %18, %17 : vector<128x128xf32>
      %20 = arith.subf %16, %19 : vector<128x128xf32>
      %cst_17 = arith.constant 0.000000e+00 : f32
      %21 = vector.broadcast %cst_17 : f32 to vector<128x128xf32>
      %22 = arith.maximumf %20, %21 : vector<128x128xf32>
      %23 = math.sqrt %22 : vector<128x128xf32>
      %cst_18 = arith.constant 1.000000e+00 : f32
      %24 = vector.broadcast %cst_18 : f32 to vector<128x128xf32>
      %25 = arith.mulf %23, %24 : vector<128x128xf32>
      %c0_19 = arith.constant 0 : index
      %c0_20 = arith.constant 0 : index
      %26 = vector.load %arg7[%c0_19, %c0_20] : memref<128x128xf32, #tpu.memory_space<vmem>>, vector<128x128xf32>
      tpu.vector_store %arg7[%c0_19, %c0_20], %25 {strides = array<i32>} : memref<128x128xf32, #tpu.memory_space<vmem>>, vector<128x128xf32>,
    } else {
    }
    return
  }
  func.func @transform_0(%arg0: i32, %arg1: i32, %arg2: i32) -> (i32, i32) {
    %c0_i32 = arith.constant 0 : i32
    %c0_i32_0 = arith.constant 0 : i32
    return %arg0, %c0_i32 : i32, i32
  }
  func.func @transform_1(%arg0: i32, %arg1: i32, %arg2: i32) -> (i32, i32) {
    %c0_i32 = arith.constant 0 : i32
    %c0_i32_0 = arith.constant 0 : i32
    return %c0_i32, %arg1 : i32, i32
  }
  func.func @transform_2(%arg0: i32, %arg1: i32, %arg2: i32) -> (i32, i32) {
    %c0_i32 = arith.constant 0 : i32
    return %arg0, %arg2 : i32, i32
  }
  func.func @transform_3(%arg0: i32, %arg1: i32, %arg2: i32) -> (i32, i32) {
    %c0_i32 = arith.constant 0 : i32
    return %arg1, %arg2 : i32, i32
  }
  func.func @transform_4(%arg0: i32, %arg1: i32, %arg2: i32) -> (i32, i32) {
    %c0_i32 = arith.constant 0 : i32
    return %arg0, %arg1 : i32, i32
  }
}

</mosaic_0001>

<llo_original>
// kernel: _distance_matrices.3
$region0: #{_distance_matrices.3}
  #allocation0 [shape = 'u32[]', space=smem, size = 0x4, offset = 0x4, fixed_abs, tag = 'smem constant byte address 0x4 - core index']
  #allocation1 [shape = 'u32[72,128]{1,0:T(1,128)}', space=vmem, size = 0x9000, scoped, tag = 'internal scratch']
  #allocation2 [shape = 'f32[128,128]{1,0:T(8,128)}', space=vmem, size = 0x10000, scoped, tag = 'scratch operand']
  %s0 = inlined_call_operand.vmem [shape: f32[128,1], index: 0, kind: input, shape index: {}]
  %s1 = inlined_call_operand.vmem [shape: f32[1,128], index: 1, kind: input, shape index: {}]
  %s2 = inlined_call_operand.vmem [shape: f32[128,128], index: 2, kind: input, shape index: {}, may-alias: {2,3}]
  %s3 = inlined_call_operand.vmem [shape: f32[128,128], index: 3, kind: input, shape index: {}, may-alias: {2,3}]
  %s4 = inlined_call_operand.vmem [shape: f32[128,128], index: 4, kind: output, shape index: {}]
  %s5 = sld [smem:[#allocation0]]
  $region34: #{_distance_matrices.3} parent=0
    _
  %s7 = ssub.s32 1, %s5
  %s8 = scalar_select 0, %s7, %s5
  // Predicated region
  $region2: #{_distance_matrices.3} parent=0 // pred_check
    _
  $region3: #{_distance_matrices.3} parent=0 // pred_check_branch
    %10 = sbr.rel (0) target = $region5
  $region4: #{_distance_matrices.3} parent=0 // pred_region
    _
  $region5: #{_distance_matrices.3} parent=0 // pred_fallthru
    _
  // Predicated region
  $region6: #{_distance_matrices.3} parent=0 // pred_check
    _
  $region7: #{_distance_matrices.3} parent=0 // pred_check_branch
    %12 = sbr.rel (0) target = $region9
  $region8: #{_distance_matrices.3} parent=0 // pred_region
    _
  $region9: #{_distance_matrices.3} parent=0 // pred_fallthru
    _
  // Predicated region
  $region10: #{_distance_matrices.3} parent=0 // pred_check
    _
  $region11: #{_distance_matrices.3} parent=0 // pred_check_branch
    %14 = sbr.rel (0) target = $region13
  $region12: #{_distance_matrices.3} parent=0 // pred_region
    _
  $region13: #{_distance_matrices.3} parent=0 // pred_fallthru
    _
  // Predicated region
  $region14: #{_distance_matrices.3} parent=0 // pred_check
    _
  $region15: #{_distance_matrices.3} parent=0 // pred_check_branch
    %16 = sbr.rel (0) target = $region17
  $region16: #{_distance_matrices.3} parent=0 // pred_region
    _
  $region17: #{_distance_matrices.3} parent=0 // pred_fallthru
    _
  %p17 = scmp.eq.s32.totalorder 0, 0
  // Predicated region
  $region18: #{_distance_matrices.3} parent=0 // pred_check
    %p18 = pneg %p17
  $region19: #{_distance_matrices.3} parent=0 // pred_check_branch
    %20 = sbr.rel (%p18) target = $region21
  $region20: #{_distance_matrices.3} parent=0 // pred_region
    %21 = vst [vmem:[#allocation2] sm:$0xff] 0.0
    %22 = vst [vmem:[#allocation2 + $0x8] sm:$0xff] 0.0
    %23 = vst [vmem:[#allocation2 + $0x10] sm:$0xff] 0.0
    %24 = vst [vmem:[#allocation2 + $0x18] sm:$0xff] 0.0
    %25 = vst [vmem:[#allocation2 + $0x20] sm:$0xff] 0.0
    %26 = vst [vmem:[#allocation2 + $0x28] sm:$0xff] 0.0
    %27 = vst [vmem:[#allocation2 + $0x30] sm:$0xff] 0.0
    %28 = vst [vmem:[#allocation2 + $0x38] sm:$0xff] 0.0
    %29 = vst [vmem:[#allocation2 + $0x40] sm:$0xff] 0.0
    %30 = vst [vmem:[#allocation2 + $0x48] sm:$0xff] 0.0
    %31 = vst [vmem:[#allocation2 + $0x50] sm:$0xff] 0.0
    %32 = vst [vmem:[#allocation2 + $0x58] sm:$0xff] 0.0
    %33 = vst [vmem:[#allocation2 + $0x60] sm:$0xff] 0.0
    %34 = vst [vmem:[#allocation2 + $0x68] sm:$0xff] 0.0
    %35 = vst [vmem:[#allocation2 + $0x70] sm:$0xff] 0.0
    %36 = vst [vmem:[#allocation2 + $0x78] sm:$0xff] 0.0
  $region21: #{_distance_matrices.3} parent=0 // pred_fallthru
    _
  %v37 = vld [vmem:[#allocation2] sm:$0xff]
  %v38 = vld [vmem:[#allocation2 + $0x8] sm:$0xff]
  %v39 = vld [vmem:[#allocation2 + $0x10] sm:$0xff]
  %v40 = vld [vmem:[#allocation2 + $0x18] sm:$0xff]
  %v41 = vld [vmem:[#allocation2 + $0x20] sm:$0xff]
  %v42 = vld [vmem:[#allocation2 + $0x28] sm:$0xff]
  %v43 = vld [vmem:[#allocation2 + $0x30] sm:$0xff]
  %v44 = vld [vmem:[#allocation2 + $0x38] sm:$0xff]
  %v45 = vld [vmem:[#allocation2 + $0x40] sm:$0xff]
  %v46 = vld [vmem:[#allocation2 + $0x48] sm:$0xff]
  %v47 = vld [vmem:[#allocation2 + $0x50] sm:$0xff]
  %v48 = vld [vmem:[#allocation2 + $0x58] sm:$0xff]
  %v49 = vld [vmem:[#allocation2 + $0x60] sm:$0xff]
  %v50 = vld [vmem:[#allocation2 + $0x68] sm:$0xff]
  %v51 = vld [vmem:[#allocation2 + $0x70] sm:$0xff]
  %v52 = vld [vmem:[#allocation2 + $0x78] sm:$0xff]
  %v53 = vld [vmem:[%s2] sm:$0xff]
  %v54 = vld [vmem:[%s2 + $0x8] sm:$0xff]
  %v55 = vld [vmem:[%s2 + $0x10] sm:$0xff]
  %v56 = vld [vmem:[%s2 + $0x18] sm:$0xff]
  %v57 = vld [vmem:[%s2 + $0x20] sm:$0xff]
  %v58 = vld [vmem:[%s2 + $0x28] sm:$0xff]
  %v59 = vld [vmem:[%s2 + $0x30] sm:$0xff]
  %v60 = vld [vmem:[%s2 + $0x38] sm:$0xff]
  %v61 = vld [vmem:[%s2 + $0x40] sm:$0xff]
  %v62 = vld [vmem:[%s2 + $0x48] sm:$0xff]
  %v63 = vld [vmem:[%s2 + $0x50] sm:$0xff]
  %v64 = vld [vmem:[%s2 + $0x58] sm:$0xff]
  %v65 = vld [vmem:[%s2 + $0x60] sm:$0xff]
  %v66 = vld [vmem:[%s2 + $0x68] sm:$0xff]
  %v67 = vld [vmem:[%s2 + $0x70] sm:$0xff]
  %v68 = vld [vmem:[%s2 + $0x78] sm:$0xff]
  %v69 = vld [vmem:[%s3] sm:$0xff]
  %v70 = vld [vmem:[%s3 + $0x8] sm:$0xff]
  %v71 = vld [vmem:[%s3 + $0x10] sm:$0xff]
  %v72 = vld [vmem:[%s3 + $0x18] sm:$0xff]
  %v73 = vld [vmem:[%s3 + $0x20] sm:$0xff]
  %v74 = vld [vmem:[%s3 + $0x28] sm:$0xff]
  %v75 = vld [vmem:[%s3 + $0x30] sm:$0xff]
  %v76 = vld [vmem:[%s3 + $0x38] sm:$0xff]
  %v77 = vld [vmem:[%s3 + $0x40] sm:$0xff]
  %v78 = vld [vmem:[%s3 + $0x48] sm:$0xff]
  %v79 = vld [vmem:[%s3 + $0x50] sm:$0xff]
  %v80 = vld [vmem:[%s3 + $0x58] sm:$0xff]
  %v81 = vld [vmem:[%s3 + $0x60] sm:$0xff]
  %v82 = vld [vmem:[%s3 + $0x68] sm:$0xff]
  %v83 = vld [vmem:[%s3 + $0x70] sm:$0xff]
  %v84 = vld [vmem:[%s3 + $0x78] sm:$0xff]
  %85 = vmatpush.xpose.msra.mxu0 %v84
  %86 = vmatpush.xpose.msra.mxu0 %v83
  %87 = vmatpush.xpose.msra.mxu0 %v82
  %88 = vmatpush.xpose.msra.mxu0 %v81
  %89 = vmatpush.xpose.msra.mxu0 %v80
  %90 = vmatpush.xpose.msra.mxu0 %v79
  %91 = vmatpush.xpose.msra.mxu0 %v78
  %92 = vmatpush.xpose.msra.mxu0 %v77
  %93 = vmatpush.xpose.msra.mxu0 %v76
  %94 = vmatpush.xpose.msra.mxu0 %v75
  %95 = vmatpush.xpose.msra.mxu0 %v74
  %96 = vmatpush.xpose.msra.mxu0 %v73
  %97 = vmatpush.xpose.msra.mxu0 %v72
  %98 = vmatpush.xpose.msra.mxu0 %v71
  %99 = vmatpush.xpose.msra.mxu0 %v70
  %100 = vmatpush.xpose.msra.mxu0 %v69
  %101 = vmatmul.f32.gmra.mxu0 %v53
  %v102 = vpop.f32.mrf.mxu0
  %v103 = vadd.f32 0.0, %v102
  %104 = vmatmul.f32.gmra.mxu0 %v54
  %v105 = vpop.f32.mrf.mxu0
  %v106 = vadd.f32 0.0, %v105
  %107 = vmatmul.f32.gmra.mxu0 %v55
  %v108 = vpop.f32.mrf.mxu0
  %v109 = vadd.f32 0.0, %v108
  %110 = vmatmul.f32.gmra.mxu0 %v56
  %v111 = vpop.f32.mrf.mxu0
  %v112 = vadd.f32 0.0, %v111
  %113 = vmatmul.f32.gmra.mxu0 %v57
  %v114 = vpop.f32.mrf.mxu0
  %v115 = vadd.f32 0.0, %v114
  %116 = vmatmul.f32.gmra.mxu0 %v58
  %v117 = vpop.f32.mrf.mxu0
  %v118 = vadd.f32 0.0, %v117
  %119 = vmatmul.f32.gmra.mxu0 %v59
  %v120 = vpop.f32.mrf.mxu0
  %v121 = vadd.f32 0.0, %v120
  %122 = vmatmul.f32.gmra.mxu0 %v60
  %v123 = vpop.f32.mrf.mxu0
  %v124 = vadd.f32 0.0, %v123
  %125 = vmatmul.f32.gmra.mxu0 %v61
  %v126 = vpop.f32.mrf.mxu0
  %v127 = vadd.f32 0.0, %v126
  %128 = vmatmul.f32.gmra.mxu0 %v62
  %v129 = vpop.f32.mrf.mxu0
  %v130 = vadd.f32 0.0, %v129
  %131 = vmatmul.f32.gmra.mxu0 %v63
  %v132 = vpop.f32.mrf.mxu0
  %v133 = vadd.f32 0.0, %v132
  %134 = vmatmul.f32.gmra.mxu0 %v64
  %v135 = vpop.f32.mrf.mxu0
  %v136 = vadd.f32 0.0, %v135
  %137 = vmatmul.f32.gmra.mxu0 %v65
  %v138 = vpop.f32.mrf.mxu0
  %v139 = vadd.f32 0.0, %v138
  %140 = vmatmul.f32.gmra.mxu0 %v66
  %v141 = vpop.f32.mrf.mxu0
  %v142 = vadd.f32 0.0, %v141
  %143 = vmatmul.f32.gmra.mxu0 %v67
  %v144 = vpop.f32.mrf.mxu0
  %v145 = vadd.f32 0.0, %v144
  %146 = vmatmul.f32.gmra.mxu0 %v68
  %v147 = vpop.f32.mrf.mxu0
  %v148 = vadd.f32 0.0, %v147
  %149 = vdwg.mxu0
  %v150 = vadd.f32 %v37, %v103
  %v151 = vadd.f32 %v38, %v106
  %v152 = vadd.f32 %v39, %v109
  %v153 = vadd.f32 %v40, %v112
  %v154 = vadd.f32 %v41, %v115
  %v155 = vadd.f32 %v42, %v118
  %v156 = vadd.f32 %v43, %v121
  %v157 = vadd.f32 %v44, %v124
  %v158 = vadd.f32 %v45, %v127
  %v159 = vadd.f32 %v46, %v130
  %v160 = vadd.f32 %v47, %v133
  %v161 = vadd.f32 %v48, %v136
  %v162 = vadd.f32 %v49, %v139
  %v163 = vadd.f32 %v50, %v142
  %v164 = vadd.f32 %v51, %v145
  %v165 = vadd.f32 %v52, %v148
  %166 = vst [vmem:[#allocation2] sm:$0xff] %v150
  %167 = vst [vmem:[#allocation2 + $0x8] sm:$0xff] %v151
  %168 = vst [vmem:[#allocation2 + $0x10] sm:$0xff] %v152
  %169 = vst [vmem:[#allocation2 + $0x18] sm:$0xff] %v153
  %170 = vst [vmem:[#allocation2 + $0x20] sm:$0xff] %v154
  %171 = vst [vmem:[#allocation2 + $0x28] sm:$0xff] %v155
  %172 = vst [vmem:[#allocation2 + $0x30] sm:$0xff] %v156
  %173 = vst [vmem:[#allocation2 + $0x38] sm:$0xff] %v157
  %174 = vst [vmem:[#allocation2 + $0x40] sm:$0xff] %v158
  %175 = vst [vmem:[#allocation2 + $0x48] sm:$0xff] %v159
  %176 = vst [vmem:[#allocation2 + $0x50] sm:$0xff] %v160
  %177 = vst [vmem:[#allocation2 + $0x58] sm:$0xff] %v161
  %178 = vst [vmem:[#allocation2 + $0x60] sm:$0xff] %v162
  %179 = vst [vmem:[#allocation2 + $0x68] sm:$0xff] %v163
  %180 = vst [vmem:[#allocation2 + $0x70] sm:$0xff] %v164
  %181 = vst [vmem:[#allocation2 + $0x78] sm:$0xff] %v165
  // Predicated region
  $region22: #{_distance_matrices.3} parent=0 // pred_check
    %p182 = pneg %p17
  $region23: #{_distance_matrices.3} parent=0 // pred_check_branch
    %184 = sbr.rel (%p182) target = $region25
  $region24: #{_distance_matrices.3} parent=0 // pred_region
    %v185 = vld [vmem:[%s0] sm:$0xff]
    %v186 = vld [vmem:[%s0 + $0x8] sm:$0xff]
    %v187 = vld [vmem:[%s0 + $0x10] sm:$0xff]
    %v188 = vld [vmem:[%s0 + $0x18] sm:$0xff]
    %v189 = vld [vmem:[%s0 + $0x20] sm:$0xff]
    %v190 = vld [vmem:[%s0 + $0x28] sm:$0xff]
    %v191 = vld [vmem:[%s0 + $0x30] sm:$0xff]
    %v192 = vld [vmem:[%s0 + $0x38] sm:$0xff]
    %v193 = vld [vmem:[%s0 + $0x40] sm:$0xff]
    %v194 = vld [vmem:[%s0 + $0x48] sm:$0xff]
    %v195 = vld [vmem:[%s0 + $0x50] sm:$0xff]
    %v196 = vld [vmem:[%s0 + $0x58] sm:$0xff]
    %v197 = vld [vmem:[%s0 + $0x60] sm:$0xff]
    %v198 = vld [vmem:[%s0 + $0x68] sm:$0xff]
    %v199 = vld [vmem:[%s0 + $0x70] sm:$0xff]
    %v200 = vld [vmem:[%s0 + $0x78] sm:$0xff]
    %v201 = vld [vmem:[%s1] sm:$0x1]
    %203 = vset.pattern.permute.xlu0 0
    %204 = vperm.xlu0 %203, %v185
    %v205 = vpop.permute.xlu0 %204
    %208 = vset.pattern.permute.xlu0 0
    %209 = vperm.xlu0 %208, %v186
    %v210 = vpop.permute.xlu0 %209
    %213 = vset.pattern.permute.xlu0 0
    %214 = vperm.xlu0 %213, %v187
    %v215 = vpop.permute.xlu0 %214
    %218 = vset.pattern.permute.xlu0 0
    %219 = vperm.xlu0 %218, %v188
    %v220 = vpop.permute.xlu0 %219
    %223 = vset.pattern.permute.xlu0 0
    %224 = vperm.xlu0 %223, %v189
    %v225 = vpop.permute.xlu0 %224
    %228 = vset.pattern.permute.xlu0 0
    %229 = vperm.xlu0 %228, %v190
    %v230 = vpop.permute.xlu0 %229
    %233 = vset.pattern.permute.xlu0 0
    %234 = vperm.xlu0 %233, %v191
    %v235 = vpop.permute.xlu0 %234
    %238 = vset.pattern.permute.xlu0 0
    %239 = vperm.xlu0 %238, %v192
    %v240 = vpop.permute.xlu0 %239
    %243 = vset.pattern.permute.xlu0 0
    %244 = vperm.xlu0 %243, %v193
    %v245 = vpop.permute.xlu0 %244
    %248 = vset.pattern.permute.xlu0 0
    %249 = vperm.xlu0 %248, %v194
    %v250 = vpop.permute.xlu0 %249
    %253 = vset.pattern.permute.xlu0 0
    %254 = vperm.xlu0 %253, %v195
    %v255 = vpop.permute.xlu0 %254
    %258 = vset.pattern.permute.xlu0 0
    %259 = vperm.xlu0 %258, %v196
    %v260 = vpop.permute.xlu0 %259
    %263 = vset.pattern.permute.xlu0 0
    %264 = vperm.xlu0 %263, %v197
    %v265 = vpop.permute.xlu0 %264
    %268 = vset.pattern.permute.xlu0 0
    %269 = vperm.xlu0 %268, %v198
    %v270 = vpop.permute.xlu0 %269
    %273 = vset.pattern.permute.xlu0 0
    %274 = vperm.xlu0 %273, %v199
    %v275 = vpop.permute.xlu0 %274
    %278 = vset.pattern.permute.xlu0 0
    %279 = vperm.xlu0 %278, %v200
    %v280 = vpop.permute.xlu0 %279
    %v283 = vperm.slane %v201, 0
    %v285 = vadd.f32 %v205, %v283
    %v286 = vadd.f32 %v210, %v283
    %v287 = vadd.f32 %v215, %v283
    %v288 = vadd.f32 %v220, %v283
    %v289 = vadd.f32 %v225, %v283
    %v290 = vadd.f32 %v230, %v283
    %v291 = vadd.f32 %v235, %v283
    %v292 = vadd.f32 %v240, %v283
    %v293 = vadd.f32 %v245, %v283
    %v294 = vadd.f32 %v250, %v283
    %v295 = vadd.f32 %v255, %v283
    %v296 = vadd.f32 %v260, %v283
    %v297 = vadd.f32 %v265, %v283
    %v298 = vadd.f32 %v270, %v283
    %v299 = vadd.f32 %v275, %v283
    %v300 = vadd.f32 %v280, %v283
    %v301 = vld [vmem:[#allocation2] sm:$0xff]
    %v302 = vld [vmem:[#allocation2 + $0x8] sm:$0xff]
    %v303 = vld [vmem:[#allocation2 + $0x10] sm:$0xff]
    %v304 = vld [vmem:[#allocation2 + $0x18] sm:$0xff]
    %v305 = vld [vmem:[#allocation2 + $0x20] sm:$0xff]
    %v306 = vld [vmem:[#allocation2 + $0x28] sm:$0xff]
    %v307 = vld [vmem:[#allocation2 + $0x30] sm:$0xff]
    %v308 = vld [vmem:[#allocation2 + $0x38] sm:$0xff]
    %v309 = vld [vmem:[#allocation2 + $0x40] sm:$0xff]
    %v310 = vld [vmem:[#allocation2 + $0x48] sm:$0xff]
    %v311 = vld [vmem:[#allocation2 + $0x50] sm:$0xff]
    %v312 = vld [vmem:[#allocation2 + $0x58] sm:$0xff]
    %v313 = vld [vmem:[#allocation2 + $0x60] sm:$0xff]
    %v314 = vld [vmem:[#allocation2 + $0x68] sm:$0xff]
    %v315 = vld [vmem:[#allocation2 + $0x70] sm:$0xff]
    %v316 = vld [vmem:[#allocation2 + $0x78] sm:$0xff]
    %v317 = vmul.f32 %v301, 2.0
    %v318 = vmul.f32 %v302, 2.0
    %v319 = vmul.f32 %v303, 2.0
    %v320 = vmul.f32 %v304, 2.0
    %v321 = vmul.f32 %v305, 2.0
    %v322 = vmul.f32 %v306, 2.0
    %v323 = vmul.f32 %v307, 2.0
    %v324 = vmul.f32 %v308, 2.0
    %v325 = vmul.f32 %v309, 2.0
    %v326 = vmul.f32 %v310, 2.0
    %v327 = vmul.f32 %v311, 2.0
    %v328 = vmul.f32 %v312, 2.0
    %v329 = vmul.f32 %v313, 2.0
    %v330 = vmul.f32 %v314, 2.0
    %v331 = vmul.f32 %v315, 2.0
    %v332 = vmul.f32 %v316, 2.0
    %v333 = vsub.f32 %v285, %v317
    %v334 = vsub.f32 %v286, %v318
    %v335 = vsub.f32 %v287, %v319
    %v336 = vsub.f32 %v288, %v320
    %v337 = vsub.f32 %v289, %v321
    %v338 = vsub.f32 %v290, %v322
    %v339 = vsub.f32 %v291, %v323
    %v340 = vsub.f32 %v292, %v324
    %v341 = vsub.f32 %v293, %v325
    %v342 = vsub.f32 %v294, %v326
    %v343 = vsub.f32 %v295, %v327
    %v344 = vsub.f32 %v296, %v328
    %v345 = vsub.f32 %v297, %v329
    %v346 = vsub.f32 %v298, %v330
    %v347 = vsub.f32 %v299, %v331
    %v348 = vsub.f32 %v300, %v332
    %v349 = vmax.f32 %v333, 0.0
    %v350 = vmax.f32 %v334, 0.0
    %v351 = vmax.f32 %v335, 0.0
    %v352 = vmax.f32 %v336, 0.0
    %v353 = vmax.f32 %v337, 0.0
    %v354 = vmax.f32 %v338, 0.0
    %v355 = vmax.f32 %v339, 0.0
    %v356 = vmax.f32 %v340, 0.0
    %v357 = vmax.f32 %v341, 0.0
    %v358 = vmax.f32 %v342, 0.0
    %v359 = vmax.f32 %v343, 0.0
    %v360 = vmax.f32 %v344, 0.0
    %v361 = vmax.f32 %v345, 0.0
    %v362 = vmax.f32 %v346, 0.0
    %v363 = vmax.f32 %v347, 0.0
    %v364 = vmax.f32 %v348, 0.0
    %v365 = vrsqrt.pop %v349
    %v366 = vmul.f32 %v365, %v349
    %v367 = vmul.f32 %v366, %v365
    %v368 = vmul.f32 0.5, %v367
    %v369 = vsub.f32 1.5, %v368
    %v370 = vmul.f32 %v365, %v369
    %v371 = vmul.f32 %v349, %v370
    %vm372 = vcmp.eq.f32.partialorder %v349, inf
    %v373 = vsel %vm372, %v349, %v371
    %vm374 = vcmp.eq.f32.partialorder %v349, 0.0
    %v375 = vand.u32 %v349, 2147483648
    %v376 = vsel %vm374, %v375, %v373
    %v377 = vrsqrt.pop %v350
    %v378 = vmul.f32 %v377, %v350
    %v379 = vmul.f32 %v378, %v377
    %v380 = vmul.f32 0.5, %v379
    %v381 = vsub.f32 1.5, %v380
    %v382 = vmul.f32 %v377, %v381
    %v383 = vmul.f32 %v350, %v382
    %vm384 = vcmp.eq.f32.partialorder %v350, inf
    %v385 = vsel %vm384, %v350, %v383
    %vm386 = vcmp.eq.f32.partialorder %v350, 0.0
    %v387 = vand.u32 %v350, 2147483648
    %v388 = vsel %vm386, %v387, %v385
    %v389 = vrsqrt.pop %v351
    %v390 = vmul.f32 %v389, %v351
    %v391 = vmul.f32 %v390, %v389
    %v392 = vmul.f32 0.5, %v391
    %v393 = vsub.f32 1.5, %v392
    %v394 = vmul.f32 %v389, %v393
    %v395 = vmul.f32 %v351, %v394
    %vm396 = vcmp.eq.f32.partialorder %v351, inf
    %v397 = vsel %vm396, %v351, %v395
    %vm398 = vcmp.eq.f32.partialorder %v351, 0.0
    %v399 = vand.u32 %v351, 2147483648
    %v400 = vsel %vm398, %v399, %v397
    %v401 = vrsqrt.pop %v352
    %v402 = vmul.f32 %v401, %v352
    %v403 = vmul.f32 %v402, %v401
    %v404 = vmul.f32 0.5, %v403
    %v405 = vsub.f32 1.5, %v404
    %v406 = vmul.f32 %v401, %v405
    %v407 = vmul.f32 %v352, %v406
    %vm408 = vcmp.eq.f32.partialorder %v352, inf
    %v409 = vsel %vm408, %v352, %v407
    %vm410 = vcmp.eq.f32.partialorder %v352, 0.0
    %v411 = vand.u32 %v352, 2147483648
    %v412 = vsel %vm410, %v411, %v409
    %v413 = vrsqrt.pop %v353
    %v414 = vmul.f32 %v413, %v353
    %v415 = vmul.f32 %v414, %v413
    %v416 = vmul.f32 0.5, %v415
    %v417 = vsub.f32 1.5, %v416
    %v418 = vmul.f32 %v413, %v417
    %v419 = vmul.f32 %v353, %v418
    %vm420 = vcmp.eq.f32.partialorder %v353, inf
    %v421 = vsel %vm420, %v353, %v419
    %vm422 = vcmp.eq.f32.partialorder %v353, 0.0
    %v423 = vand.u32 %v353, 2147483648
    %v424 = vsel %vm422, %v423, %v421
    %v425 = vrsqrt.pop %v354
    %v426 = vmul.f32 %v425, %v354
    %v427 = vmul.f32 %v426, %v425
    %v428 = vmul.f32 0.5, %v427
    %v429 = vsub.f32 1.5, %v428
    %v430 = vmul.f32 %v425, %v429
    %v431 = vmul.f32 %v354, %v430
    %vm432 = vcmp.eq.f32.partialorder %v354, inf
    %v433 = vsel %vm432, %v354, %v431
    %vm434 = vcmp.eq.f32.partialorder %v354, 0.0
    %v435 = vand.u32 %v354, 2147483648
    %v436 = vsel %vm434, %v435, %v433
    %v437 = vrsqrt.pop %v355
    %v438 = vmul.f32 %v437, %v355
    %v439 = vmul.f32 %v438, %v437
    %v440 = vmul.f32 0.5, %v439
    %v441 = vsub.f32 1.5, %v440
    %v442 = vmul.f32 %v437, %v441
    %v443 = vmul.f32 %v355, %v442
    %vm444 = vcmp.eq.f32.partialorder %v355, inf
    %v445 = vsel %vm444, %v355, %v443
    %vm446 = vcmp.eq.f32.partialorder %v355, 0.0
    %v447 = vand.u32 %v355, 2147483648
    %v448 = vsel %vm446, %v447, %v445
    %v449 = vrsqrt.pop %v356
    %v450 = vmul.f32 %v449, %v356
    %v451 = vmul.f32 %v450, %v449
    %v452 = vmul.f32 0.5, %v451
    %v453 = vsub.f32 1.5, %v452
    %v454 = vmul.f32 %v449, %v453
    %v455 = vmul.f32 %v356, %v454
    %vm456 = vcmp.eq.f32.partialorder %v356, inf
    %v457 = vsel %vm456, %v356, %v455
    %vm458 = vcmp.eq.f32.partialorder %v356, 0.0
    %v459 = vand.u32 %v356, 2147483648
    %v460 = vsel %vm458, %v459, %v457
    %v461 = vrsqrt.pop %v357
    %v462 = vmul.f32 %v461, %v357
    %v463 = vmul.f32 %v462, %v461
    %v464 = vmul.f32 0.5, %v463
    %v465 = vsub.f32 1.5, %v464
    %v466 = vmul.f32 %v461, %v465
    %v467 = vmul.f32 %v357, %v466
    %vm468 = vcmp.eq.f32.partialorder %v357, inf
    %v469 = vsel %vm468, %v357, %v467
    %vm470 = vcmp.eq.f32.partialorder %v357, 0.0
    %v471 = vand.u32 %v357, 2147483648
    %v472 = vsel %vm470, %v471, %v469
    %v473 = vrsqrt.pop %v358
    %v474 = vmul.f32 %v473, %v358
    %v475 = vmul.f32 %v474, %v473
    %v476 = vmul.f32 0.5, %v475
    %v477 = vsub.f32 1.5, %v476
    %v478 = vmul.f32 %v473, %v477
    %v479 = vmul.f32 %v358, %v478
    %vm480 = vcmp.eq.f32.partialorder %v358, inf
    %v481 = vsel %vm480, %v358, %v479
    %vm482 = vcmp.eq.f32.partialorder %v358, 0.0
    %v483 = vand.u32 %v358, 2147483648
    %v484 = vsel %vm482, %v483, %v481
    %v485 = vrsqrt.pop %v359
    %v486 = vmul.f32 %v485, %v359
    %v487 = vmul.f32 %v486, %v485
    %v488 = vmul.f32 0.5, %v487
    %v489 = vsub.f32 1.5, %v488
    %v490 = vmul.f32 %v485, %v489
    %v491 = vmul.f32 %v359, %v490
    %vm492 = vcmp.eq.f32.partialorder %v359, inf
    %v493 = vsel %vm492, %v359, %v491
    %vm494 = vcmp.eq.f32.partialorder %v359, 0.0
    %v495 = vand.u32 %v359, 2147483648
    %v496 = vsel %vm494, %v495, %v493
    %v497 = vrsqrt.pop %v360
    %v498 = vmul.f32 %v497, %v360
    %v499 = vmul.f32 %v498, %v497
    %v500 = vmul.f32 0.5, %v499
    %v501 = vsub.f32 1.5, %v500
    %v502 = vmul.f32 %v497, %v501
    %v503 = vmul.f32 %v360, %v502
    %vm504 = vcmp.eq.f32.partialorder %v360, inf
    %v505 = vsel %vm504, %v360, %v503
    %vm506 = vcmp.eq.f32.partialorder %v360, 0.0
    %v507 = vand.u32 %v360, 2147483648
    %v508 = vsel %vm506, %v507, %v505
    %v509 = vrsqrt.pop %v361
    %v510 = vmul.f32 %v509, %v361
    %v511 = vmul.f32 %v510, %v509
    %v512 = vmul.f32 0.5, %v511
    %v513 = vsub.f32 1.5, %v512
    %v514 = vmul.f32 %v509, %v513
    %v515 = vmul.f32 %v361, %v514
    %vm516 = vcmp.eq.f32.partialorder %v361, inf
    %v517 = vsel %vm516, %v361, %v515
    %vm518 = vcmp.eq.f32.partialorder %v361, 0.0
    %v519 = vand.u32 %v361, 2147483648
    %v520 = vsel %vm518, %v519, %v517
    %v521 = vrsqrt.pop %v362
    %v522 = vmul.f32 %v521, %v362
    %v523 = vmul.f32 %v522, %v521
    %v524 = vmul.f32 0.5, %v523
    %v525 = vsub.f32 1.5, %v524
    %v526 = vmul.f32 %v521, %v525
    %v527 = vmul.f32 %v362, %v526
    %vm528 = vcmp.eq.f32.partialorder %v362, inf
    %v529 = vsel %vm528, %v362, %v527
    %vm530 = vcmp.eq.f32.partialorder %v362, 0.0
    %v531 = vand.u32 %v362, 2147483648
    %v532 = vsel %vm530, %v531, %v529
    %v533 = vrsqrt.pop %v363
    %v534 = vmul.f32 %v533, %v363
    %v535 = vmul.f32 %v534, %v533
    %v536 = vmul.f32 0.5, %v535
    %v537 = vsub.f32 1.5, %v536
    %v538 = vmul.f32 %v533, %v537
    %v539 = vmul.f32 %v363, %v538
    %vm540 = vcmp.eq.f32.partialorder %v363, inf
    %v541 = vsel %vm540, %v363, %v539
    %vm542 = vcmp.eq.f32.partialorder %v363, 0.0
    %v543 = vand.u32 %v363, 2147483648
    %v544 = vsel %vm542, %v543, %v541
    %v545 = vrsqrt.pop %v364
    %v546 = vmul.f32 %v545, %v364
    %v547 = vmul.f32 %v546, %v545
    %v548 = vmul.f32 0.5, %v547
    %v549 = vsub.f32 1.5, %v548
    %v550 = vmul.f32 %v545, %v549
    %v551 = vmul.f32 %v364, %v550
    %vm552 = vcmp.eq.f32.partialorder %v364, inf
    %v553 = vsel %vm552, %v364, %v551
    %vm554 = vcmp.eq.f32.partialorder %v364, 0.0
    %v555 = vand.u32 %v364, 2147483648
    %v556 = vsel %vm554, %v555, %v553
    %557 = vst [vmem:[%s4] sm:$0xff] %v376
    %558 = vst [vmem:[%s4 + $0x8] sm:$0xff] %v388
    %559 = vst [vmem:[%s4 + $0x10] sm:$0xff] %v400
    %560 = vst [vmem:[%s4 + $0x18] sm:$0xff] %v412
    %561 = vst [vmem:[%s4 + $0x20] sm:$0xff] %v424
    %562 = vst [vmem:[%s4 + $0x28] sm:$0xff] %v436
    %563 = vst [vmem:[%s4 + $0x30] sm:$0xff] %v448
    %564 = vst [vmem:[%s4 + $0x38] sm:$0xff] %v460
    %565 = vst [vmem:[%s4 + $0x40] sm:$0xff] %v472
    %566 = vst [vmem:[%s4 + $0x48] sm:$0xff] %v484
    %567 = vst [vmem:[%s4 + $0x50] sm:$0xff] %v496
    %568 = vst [vmem:[%s4 + $0x58] sm:$0xff] %v508
    %569 = vst [vmem:[%s4 + $0x60] sm:$0xff] %v520
    %570 = vst [vmem:[%s4 + $0x68] sm:$0xff] %v532
    %571 = vst [vmem:[%s4 + $0x70] sm:$0xff] %v544
    %572 = vst [vmem:[%s4 + $0x78] sm:$0xff] %v556
  $region25: #{_distance_matrices.3} parent=0 // pred_fallthru
    _
  // Predicated region
  $region26: #{_distance_matrices.3} parent=0 // pred_check
    _
  $region27: #{_distance_matrices.3} parent=0 // pred_check_branch
    %574 = sbr.rel (0) target = $region29
  $region28: #{_distance_matrices.3} parent=0 // pred_region
    _
  $region29: #{_distance_matrices.3} parent=0 // pred_fallthru
    _
  // Predicated region
  $region30: #{_distance_matrices.3} parent=0 // pred_check
    _
  $region31: #{_distance_matrices.3} parent=0 // pred_check_branch
    %576 = sbr.rel (0) target = $region33
  $region32: #{_distance_matrices.3} parent=0 // pred_region
    _
  $region33: #{_distance_matrices.3} parent=0 // pred_fallthru
    _

// kernel: _distance_matrices.2
$region0: #{_distance_matrices.2}
  #allocation0 [shape = 'u32[]', space=smem, size = 0x4, offset = 0x4, fixed_abs, tag = 'smem constant byte address 0x4 - core index']
  #allocation1 [shape = 'u32[72,128]{1,0:T(1,128)}', space=vmem, size = 0x9000, scoped, tag = 'internal scratch']
  #allocation2 [shape = 'f32[128,128]{1,0:T(8,128)}', space=vmem, size = 0x10000, scoped, tag = 'scratch operand']
  %s0 = inlined_call_operand.vmem [shape: f32[128,1], index: 0, kind: input, shape index: {}]
  %s1 = inlined_call_operand.vmem [shape: f32[1,128], index: 1, kind: input, shape index: {}]
  %s2 = inlined_call_operand.vmem [shape: f32[128,1024], index: 2, kind: input, shape index: {}, may-alias: {2,3}]
  %s3 = inlined_call_operand.vmem [shape: f32[128,1024], index: 3, kind: input, shape index: {}, may-alias: {2,3}]
  %s4 = inlined_call_operand.vmem [shape: f32[128,128], index: 4, kind: output, shape index: {}]
  %s5 = sld [smem:[#allocation0]]
  $region103: #{_distance_matrices.2} parent=0
    _
  %s7 = ssub.s32 1, %s5
  %s8 = scalar_select 0, %s7, %s5
  $region1: #{_distance_matrices.2} parent=0
    #allocation3 [shape = 'u8[524288]{0}', space=vmem, size = 0x80000, scoped, tag = 'input window, operand 2']
    #allocation4 [shape = 'u8[524288]{0}', space=vmem, size = 0x80000, scoped, tag = 'input window, operand 3']
    loop: start=0, step=1, limit=4
    $region2: #{_distance_matrices.2} parent=1 // loop_pre_header
      _
    $region3: #{_distance_matrices.2} parent=1 // loop_header
      %s10 = sphi 0, %s14
      %p11 = scmp.ge.s32.totalorder %s10, 4
      %s17 = sphi 0, %s36
      %s18 = sphi 0, %s32
      %s19 = sphi 0, %s28
      %s20 = sphi 0, %s17
      %s21 = sphi 0, %s18
      %s22 = sphi 0, %s19
      %s23 = sphi 0, %s20
      %s24 = sphi 0, %s21
      %s25 = sphi 0, %s22
      %s39 = sphi 0, %s41
      %s42 = sphi 0, %s39
      %s43 = sphi 0, %s42
      %s59 = sphi 0, %s43
      %s65 = sphi 0, %s67
      %s68 = sphi 0, %s65
      %s69 = sphi 0, %s68
      %s85 = sphi 0, %s69
      %s93 = sphi 0, %s95
      %s96 = sphi 0, %s93
      %s97 = sphi 0, %s96
      %s113 = sphi 0, %s97
      %s121 = sphi 0, %s123
      %s124 = sphi 0, %s121
      %s125 = sphi 0, %s124
      %s141 = sphi 0, %s125
      %s149 = sphi 0, %s151
      %s152 = sphi 0, %s149
      %s153 = sphi 0, %s152
      %s169 = sphi 0, %s153
    $region4: #{_distance_matrices.2} parent=1 // loop_header_branch
      %13 = sbr.rel (%p11) target = $region8
    $region5: #{_distance_matrices.2} parent=1 // loop_body
      %s15 = ssub.s32 %s10, 1
      %s16 = ssub.s32 %s10, 2
      %s26 = sadd.s32 1, %s19
      %p27 = scmp.ge.s32.totalorder %s26, 2
      %s28 = scalar_select %p27, 0, %s26
      %s29 = sadd.s32 1, %s18
      %s30 = scalar_select %p27, %s29, %s18
      %p31 = scmp.ge.s32.totalorder %s30, 1
      %s32 = scalar_select %p31, 0, %s30
      %s33 = sadd.s32 1, %s17
      %s34 = scalar_select %p31, %s33, %s17
      %p35 = scmp.ge.s32.totalorder %s34, 1
      %s36 = scalar_select %p35, 0, %s34
      %s37 = ssub.s32 %s17, %s36
      %p38 = scmp.eq.s32.totalorder %s37, 0
      %s40 = sadd.s32 %s39, 1
      %s41 = scalar_select %p38, %s39, %s40
      %p44 = pneg %p38
      %p45 = scmp.eq.s32.totalorder %s10, 1
      %p46 = por %p44, %p45
      %p47 = scmp.ne.s32.totalorder %s39, %s42
      %p48 = scmp.eq.s32.totalorder %s10, 0
      %p49 = por %p47, %p48
      %p50 = scmp.ne.s32.totalorder %s39, %s42
      %p51 = scmp.eq.s32.totalorder %s15, 1
      %p52 = por %p50, %p51
      %p53 = scmp.ne.s32.totalorder %s42, %s43
      %p54 = scmp.eq.s32.totalorder %s15, 0
      %p55 = por %p53, %p54
      %p56 = scmp.ne.s32.totalorder %s42, %s43
      %p57 = scmp.eq.s32.totalorder %s16, 1
      %p58 = por %p56, %p57
      %p60 = scmp.ne.s32.totalorder %s43, %s59
      %p61 = scmp.eq.s32.totalorder %s16, 0
      %p62 = por %p60, %p61
      %s63 = ssub.s32 %s18, %s32
      %p64 = scmp.eq.s32.totalorder %s63, 0
      %s66 = sadd.s32 %s65, 1
      %s67 = scalar_select %p64, %s65, %s66
      %p70 = pneg %p64
      %p71 = scmp.eq.s32.totalorder %s10, 1
      %p72 = por %p70, %p71
      %p73 = scmp.ne.s32.totalorder %s65, %s68
      %p74 = scmp.eq.s32.totalorder %s10, 0
      %p75 = por %p73, %p74
      %p76 = scmp.ne.s32.totalorder %s65, %s68
      %p77 = scmp.eq.s32.totalorder %s15, 1
      %p78 = por %p76, %p77
      %p79 = scmp.ne.s32.totalorder %s68, %s69
      %p80 = scmp.eq.s32.totalorder %s15, 0
      %p81 = por %p79, %p80
      %p82 = scmp.ne.s32.totalorder %s68, %s69
      %p83 = scmp.eq.s32.totalorder %s16, 1
      %p84 = por %p82, %p83
      %p86 = scmp.ne.s32.totalorder %s69, %s85
      %p87 = scmp.eq.s32.totalorder %s16, 0
      %p88 = por %p86, %p87
      %s89 = ssub.s32 %s17, %s36
      %s90 = ssub.s32 %s19, %s28
      %s91 = sor.u32 %s89, %s90
      %p92 = scmp.eq.s32.totalorder %s91, 0
      %s94 = sadd.s32 %s93, 1
      %s95 = scalar_select %p92, %s93, %s94
      %p98 = pneg %p92
      %p99 = scmp.eq.s32.totalorder %s10, 1
      %p100 = por %p98, %p99
      %p101 = scmp.ne.s32.totalorder %s93, %s96
      %p102 = scmp.eq.s32.totalorder %s10, 0
      %p103 = por %p101, %p102
      %p104 = scmp.ne.s32.totalorder %s93, %s96
      %p105 = scmp.eq.s32.totalorder %s15, 1
      %p106 = por %p104, %p105
      %p107 = scmp.ne.s32.totalorder %s96, %s97
      %p108 = scmp.eq.s32.totalorder %s15, 0
      %p109 = por %p107, %p108
      %p110 = scmp.ne.s32.totalorder %s96, %s97
      %p111 = scmp.eq.s32.totalorder %s16, 1
      %p112 = por %p110, %p111
      %p114 = scmp.ne.s32.totalorder %s97, %s113
      %p115 = scmp.eq.s32.totalorder %s16, 0
      %p116 = por %p114, %p115
      %s117 = ssub.s32 %s18, %s32
      %s118 = ssub.s32 %s19, %s28
      %s119 = sor.u32 %s117, %s118
      %p120 = scmp.eq.s32.totalorder %s119, 0
      %s122 = sadd.s32 %s121, 1
      %s123 = scalar_select %p120, %s121, %s122
      %p126 = pneg %p120
      %p127 = scmp.eq.s32.totalorder %s10, 1
      %p128 = por %p126, %p127
      %p129 = scmp.ne.s32.totalorder %s121, %s124
      %p130 = scmp.eq.s32.totalorder %s10, 0
      %p131 = por %p129, %p130
      %p132 = scmp.ne.s32.totalorder %s121, %s124
      %p133 = scmp.eq.s32.totalorder %s15, 1
      %p134 = por %p132, %p133
      %p135 = scmp.ne.s32.totalorder %s124, %s125
      %p136 = scmp.eq.s32.totalorder %s15, 0
      %p137 = por %p135, %p136
      %p138 = scmp.ne.s32.totalorder %s124, %s125
      %p139 = scmp.eq.s32.totalorder %s16, 1
      %p140 = por %p138, %p139
      %p142 = scmp.ne.s32.totalorder %s125, %s141
      %p143 = scmp.eq.s32.totalorder %s16, 0
      %p144 = por %p142, %p143
      %s145 = ssub.s32 %s17, %s36
      %s146 = ssub.s32 %s18, %s32
      %s147 = sor.u32 %s145, %s146
      %p148 = scmp.eq.s32.totalorder %s147, 0
      %s150 = sadd.s32 %s149, 1
      %s151 = scalar_select %p148, %s149, %s150
      %p154 = pneg %p148
      %p155 = scmp.eq.s32.totalorder %s10, 1
      %p156 = por %p154, %p155
      %p157 = scmp.ne.s32.totalorder %s149, %s152
      %p158 = scmp.eq.s32.totalorder %s10, 0
      %p159 = por %p157, %p158
      %p160 = scmp.ne.s32.totalorder %s149, %s152
      %p161 = scmp.eq.s32.totalorder %s15, 1
      %p162 = por %p160, %p161
      %p163 = scmp.ne.s32.totalorder %s152, %s153
      %p164 = scmp.eq.s32.totalorder %s15, 0
      %p165 = por %p163, %p164
      %p166 = scmp.ne.s32.totalorder %s152, %s153
      %p167 = scmp.eq.s32.totalorder %s16, 1
      %p168 = por %p166, %p167
      %p170 = scmp.ne.s32.totalorder %s153, %s169
      %p171 = scmp.eq.s32.totalorder %s16, 0
      %p172 = por %p170, %p171
      %p173 = scmp.le.s32.totalorder 1, %s10
      %p174 = scmp.lt.s32.totalorder %s10, 3
      %p175 = pnand %p173, %p174
      %p176 = pneg %p175
      // Predicated region
      $region9: #{_distance_matrices.2} parent=5 // pred_check
        _
      $region10: #{_distance_matrices.2} parent=5 // pred_check_branch
        %178 = sbr.rel (%p175) target = $region12
      $region11: #{_distance_matrices.2} parent=5 // pred_region
        %s179 = ssub.s32 %s10, 1
        // Predicated region
        $region13: #{_distance_matrices.2} parent=11 // pred_check
          %p180 = pneg %p55
        $region14: #{_distance_matrices.2} parent=11 // pred_check_branch
          %182 = sbr.rel (%p180) target = $region16
        $region15: #{_distance_matrices.2} parent=11 // pred_region
          %s183 = smul.u32 16, %s20
          %p184 = scmp.lt.s32.totalorder %s183, 15
          %s185 = scalar_select %p184, %s183, 15
          %s186 = smul.addr %s185, 8
          %s187 = scalar_lea.vmem %s0, %s186
          %s188 = smul.u32 16, %s20
        $region16: #{_distance_matrices.2} parent=11 // pred_fallthru
          _
        // Predicated region
        $region17: #{_distance_matrices.2} parent=11 // pred_check
          %p189 = pneg %p81
        $region18: #{_distance_matrices.2} parent=11 // pred_check_branch
          %191 = sbr.rel (%p189) target = $region20
        $region19: #{_distance_matrices.2} parent=11 // pred_region
          %p192 = scmp.lt.s32.totalorder %s21, 0
          %s193 = scalar_select %p192, %s21, 0
          %s194 = scalar_lea.vmem %s1, %s193
        $region20: #{_distance_matrices.2} parent=11 // pred_fallthru
          _
      $region12: #{_distance_matrices.2} parent=5 // pred_fallthru
        _
      %p195 = scmp.lt.s32.totalorder %s10, 2
      // Predicated region
      $region21: #{_distance_matrices.2} parent=5 // pred_check
        %p196 = pneg %p195
      $region22: #{_distance_matrices.2} parent=5 // pred_check_branch
        %198 = sbr.rel (%p196) target = $region24
      $region23: #{_distance_matrices.2} parent=5 // pred_region
        // Predicated region
        $region25: #{_distance_matrices.2} parent=23 // pred_check
          %p199 = pneg %p103
        $region26: #{_distance_matrices.2} parent=23 // pred_check_branch
          %201 = sbr.rel (%p199) target = $region28
        $region27: #{_distance_matrices.2} parent=23 // pred_region
          %s202 = sand.u32 %s93, 1
          %s203 = sand.u32 %s93, 1
          %s204 = smul.addr %s203, 512
          %s205 = scalar_lea.vmem [#allocation3], %s204
          %s206 = smul.u32 16, %s17
          %s207 = smul.u32 4, %s19
          %s208 = smul.addr %s206, 8
          %s209 = sadd.s32 %s207, %s208
          %s210 = smul.addr %s209, 8
          %s211 = scalar_lea.vmem %s2, %s210
          // Predicated region
          $region29: #{_distance_matrices.2} parent=27 // pred_check
            _
          $region30: #{_distance_matrices.2} parent=27 // pred_check_branch
            %213 = sbr.rel (0) target = $region32
          $region31: #{_distance_matrices.2} parent=27 // pred_region
            // Predicated region
            $region33: #{_distance_matrices.2} parent=31 // pred_check
              _
            $region34: #{_distance_matrices.2} parent=31 // pred_check_branch
              %215 = sbr.rel (0) target = $region36
            $region35: #{_distance_matrices.2} parent=31 // pred_region
              loop: start=0, step=1, limit=1
              $region37: #{_distance_matrices.2} parent=35 // loop_pre_header
                _
              $region38: #{_distance_matrices.2} parent=35 // loop_header
                %s217 = sphi 0, %s221
                %p218 = scmp.ge.s32.totalorder %s217, 1
                %s222 = sphi %s211, %s211
                %s223 = sphi %s205, %s205
              $region39: #{_distance_matrices.2} parent=35 // loop_header_branch
                %220 = sbr.rel (%p218) target = $region43
              $region40: #{_distance_matrices.2} parent=35 // loop_body
                %v224 = vld [vmem:[%s222] sm:$0xff]
                %225 = vst [vmem:[%s223] sm:$0xff] %v224
                %v226 = vld [vmem:[%s222 + $0x8] sm:$0xff]
                %227 = vst [vmem:[%s223 + $0x8] sm:$0xff] %v226
                %v228 = vld [vmem:[%s222 + $0x10] sm:$0xff]
                %229 = vst [vmem:[%s223 + $0x10] sm:$0xff] %v228
                %v230 = vld [vmem:[%s222 + $0x18] sm:$0xff]
                %231 = vst [vmem:[%s223 + $0x18] sm:$0xff] %v230
                %v232 = vld [vmem:[%s222 + $0x40] sm:$0xff]
                %233 = vst [vmem:[%s223 + $0x20] sm:$0xff] %v232
                %v234 = vld [vmem:[%s222 + $0x48] sm:$0xff]
                %235 = vst [vmem:[%s223 + $0x28] sm:$0xff] %v234
                %v236 = vld [vmem:[%s222 + $0x50] sm:$0xff]
                %237 = vst [vmem:[%s223 + $0x30] sm:$0xff] %v236
                %v238 = vld [vmem:[%s222 + $0x58] sm:$0xff]
                %239 = vst [vmem:[%s223 + $0x38] sm:$0xff] %v238
                %v240 = vld [vmem:[%s222 + $0x80] sm:$0xff]
                %241 = vst [vmem:[%s223 + $0x40] sm:$0xff] %v240
                %v242 = vld [vmem:[%s222 + $0x88] sm:$0xff]
                %243 = vst [vmem:[%s223 + $0x48] sm:$0xff] %v242
                %v244 = vld [vmem:[%s222 + $0x90] sm:$0xff]
                %245 = vst [vmem:[%s223 + $0x50] sm:$0xff] %v244
                %v246 = vld [vmem:[%s222 + $0x98] sm:$0xff]
                %247 = vst [vmem:[%s223 + $0x58] sm:$0xff] %v246
                %v248 = vld [vmem:[%s222 + $0xc0] sm:$0xff]
                %249 = vst [vmem:[%s223 + $0x60] sm:$0xff] %v248
                %v250 = vld [vmem:[%s222 + $0xc8] sm:$0xff]
                %251 = vst [vmem:[%s223 + $0x68] sm:$0xff] %v250
                %v252 = vld [vmem:[%s222 + $0xd0] sm:$0xff]
                %253 = vst [vmem:[%s223 + $0x70] sm:$0xff] %v252
                %v254 = vld [vmem:[%s222 + $0xd8] sm:$0xff]
                %255 = vst [vmem:[%s223 + $0x78] sm:$0xff] %v254
                %v256 = vld [vmem:[%s222 + $0x100] sm:$0xff]
                %257 = vst [vmem:[%s223 + $0x80] sm:$0xff] %v256
                %v258 = vld [vmem:[%s222 + $0x108] sm:$0xff]
                %259 = vst [vmem:[%s223 + $0x88] sm:$0xff] %v258
                %v260 = vld [vmem:[%s222 + $0x110] sm:$0xff]
                %261 = vst [vmem:[%s223 + $0x90] sm:$0xff] %v260
                %v262 = vld [vmem:[%s222 + $0x118] sm:$0xff]
                %263 = vst [vmem:[%s223 + $0x98] sm:$0xff] %v262
                %v264 = vld [vmem:[%s222 + $0x140] sm:$0xff]
                %265 = vst [vmem:[%s223 + $0xa0] sm:$0xff] %v264
                %v266 = vld [vmem:[%s222 + $0x148] sm:$0xff]
                %267 = vst [vmem:[%s223 + $0xa8] sm:$0xff] %v266
                %v268 = vld [vmem:[%s222 + $0x150] sm:$0xff]
                %269 = vst [vmem:[%s223 + $0xb0] sm:$0xff] %v268
                %v270 = vld [vmem:[%s222 + $0x158] sm:$0xff]
                %271 = vst [vmem:[%s223 + $0xb8] sm:$0xff] %v270
                %v272 = vld [vmem:[%s222 + $0x180] sm:$0xff]
                %273 = vst [vmem:[%s223 + $0xc0] sm:$0xff] %v272
                %v274 = vld [vmem:[%s222 + $0x188] sm:$0xff]
                %275 = vst [vmem:[%s223 + $0xc8] sm:$0xff] %v274
                %v276 = vld [vmem:[%s222 + $0x190] sm:$0xff]
                %277 = vst [vmem:[%s223 + $0xd0] sm:$0xff] %v276
                %v278 = vld [vmem:[%s222 + $0x198] sm:$0xff]
                %279 = vst [vmem:[%s223 + $0xd8] sm:$0xff] %v278
                %v280 = vld [vmem:[%s222 + $0x1c0] sm:$0xff]
                %281 = vst [vmem:[%s223 + $0xe0] sm:$0xff] %v280
                %v282 = vld [vmem:[%s222 + $0x1c8] sm:$0xff]
                %283 = vst [vmem:[%s223 + $0xe8] sm:$0xff] %v282
                %v284 = vld [vmem:[%s222 + $0x1d0] sm:$0xff]
                %285 = vst [vmem:[%s223 + $0xf0] sm:$0xff] %v284
                %v286 = vld [vmem:[%s222 + $0x1d8] sm:$0xff]
                %287 = vst [vmem:[%s223 + $0xf8] sm:$0xff] %v286
                %v288 = vld [vmem:[%s222 + $0x200] sm:$0xff]
                %289 = vst [vmem:[%s223 + $0x100] sm:$0xff] %v288
                %v290 = vld [vmem:[%s222 + $0x208] sm:$0xff]
                %291 = vst [vmem:[%s223 + $0x108] sm:$0xff] %v290
                %v292 = vld [vmem:[%s222 + $0x210] sm:$0xff]
                %293 = vst [vmem:[%s223 + $0x110] sm:$0xff] %v292
                %v294 = vld [vmem:[%s222 + $0x218] sm:$0xff]
                %295 = vst [vmem:[%s223 + $0x118] sm:$0xff] %v294
                %v296 = vld [vmem:[%s222 + $0x240] sm:$0xff]
                %297 = vst [vmem:[%s223 + $0x120] sm:$0xff] %v296
                %v298 = vld [vmem:[%s222 + $0x248] sm:$0xff]
                %299 = vst [vmem:[%s223 + $0x128] sm:$0xff] %v298
                %v300 = vld [vmem:[%s222 + $0x250] sm:$0xff]
                %301 = vst [vmem:[%s223 + $0x130] sm:$0xff] %v300
                %v302 = vld [vmem:[%s222 + $0x258] sm:$0xff]
                %303 = vst [vmem:[%s223 + $0x138] sm:$0xff] %v302
                %v304 = vld [vmem:[%s222 + $0x280] sm:$0xff]
                %305 = vst [vmem:[%s223 + $0x140] sm:$0xff] %v304
                %v306 = vld [vmem:[%s222 + $0x288] sm:$0xff]
                %307 = vst [vmem:[%s223 + $0x148] sm:$0xff] %v306
                %v308 = vld [vmem:[%s222 + $0x290] sm:$0xff]
                %309 = vst [vmem:[%s223 + $0x150] sm:$0xff] %v308
                %v310 = vld [vmem:[%s222 + $0x298] sm:$0xff]
                %311 = vst [vmem:[%s223 + $0x158] sm:$0xff] %v310
                %v312 = vld [vmem:[%s222 + $0x2c0] sm:$0xff]
                %313 = vst [vmem:[%s223 + $0x160] sm:$0xff] %v312
                %v314 = vld [vmem:[%s222 + $0x2c8] sm:$0xff]
                %315 = vst [vmem:[%s223 + $0x168] sm:$0xff] %v314
                %v316 = vld [vmem:[%s222 + $0x2d0] sm:$0xff]
                %317 = vst [vmem:[%s223 + $0x170] sm:$0xff] %v316
                %v318 = vld [vmem:[%s222 + $0x2d8] sm:$0xff]
                %319 = vst [vmem:[%s223 + $0x178] sm:$0xff] %v318
                %v320 = vld [vmem:[%s222 + $0x300] sm:$0xff]
                %321 = vst [vmem:[%s223 + $0x180] sm:$0xff] %v320
                %v322 = vld [vmem:[%s222 + $0x308] sm:$0xff]
                %323 = vst [vmem:[%s223 + $0x188] sm:$0xff] %v322
                %v324 = vld [vmem:[%s222 + $0x310] sm:$0xff]
                %325 = vst [vmem:[%s223 + $0x190] sm:$0xff] %v324
                %v326 = vld [vmem:[%s222 + $0x318] sm:$0xff]
                %327 = vst [vmem:[%s223 + $0x198] sm:$0xff] %v326
                %v328 = vld [vmem:[%s222 + $0x340] sm:$0xff]
                %329 = vst [vmem:[%s223 + $0x1a0] sm:$0xff] %v328
                %v330 = vld [vmem:[%s222 + $0x348] sm:$0xff]
                %331 = vst [vmem:[%s223 + $0x1a8] sm:$0xff] %v330
                %v332 = vld [vmem:[%s222 + $0x350] sm:$0xff]
                %333 = vst [vmem:[%s223 + $0x1b0] sm:$0xff] %v332
                %v334 = vld [vmem:[%s222 + $0x358] sm:$0xff]
                %335 = vst [vmem:[%s223 + $0x1b8] sm:$0xff] %v334
                %v336 = vld [vmem:[%s222 + $0x380] sm:$0xff]
                %337 = vst [vmem:[%s223 + $0x1c0] sm:$0xff] %v336
                %v338 = vld [vmem:[%s222 + $0x388] sm:$0xff]
                %339 = vst [vmem:[%s223 + $0x1c8] sm:$0xff] %v338
                %v340 = vld [vmem:[%s222 + $0x390] sm:$0xff]
                %341 = vst [vmem:[%s223 + $0x1d0] sm:$0xff] %v340
                %v342 = vld [vmem:[%s222 + $0x398] sm:$0xff]
                %343 = vst [vmem:[%s223 + $0x1d8] sm:$0xff] %v342
                %v344 = vld [vmem:[%s222 + $0x3c0] sm:$0xff]
                %345 = vst [vmem:[%s223 + $0x1e0] sm:$0xff] %v344
                %v346 = vld [vmem:[%s222 + $0x3c8] sm:$0xff]
                %347 = vst [vmem:[%s223 + $0x1e8] sm:$0xff] %v346
                %v348 = vld [vmem:[%s222 + $0x3d0] sm:$0xff]
                %349 = vst [vmem:[%s223 + $0x1f0] sm:$0xff] %v348
                %v350 = vld [vmem:[%s222 + $0x3d8] sm:$0xff]
                %351 = vst [vmem:[%s223 + $0x1f8] sm:$0xff] %v350
              $region41: #{_distance_matrices.2} parent=35 // loop_footer
                %s221 = sadd.s32 1, %s217
              $region42: #{_distance_matrices.2} parent=35 // loop_footer_branch
                %216 = sbr.rel target = $region38
              $region43: #{_distance_matrices.2} parent=35 // loop_exit
                _
            $region36: #{_distance_matrices.2} parent=31 // pred_fallthru
              _
            // Predicated region
            $region44: #{_distance_matrices.2} parent=31 // pred_check
              _
            $region45: #{_distance_matrices.2} parent=31 // pred_check_branch
              %353 = sbr.rel target = $region47
            $region46: #{_distance_matrices.2} parent=31 // pred_region
              _
            $region47: #{_distance_matrices.2} parent=31 // pred_fallthru
              _
          $region32: #{_distance_matrices.2} parent=27 // pred_fallthru
            _
          %354 = vnop
        $region28: #{_distance_matrices.2} parent=23 // pred_fallthru
          _
        // Predicated region
        $region48: #{_distance_matrices.2} parent=23 // pred_check
          %p355 = pneg %p131
        $region49: #{_distance_matrices.2} parent=23 // pred_check_branch
          %357 = sbr.rel (%p355) target = $region51
        $region50: #{_distance_matrices.2} parent=23 // pred_region
          %s358 = sand.u32 %s121, 1
          %s359 = sand.u32 %s121, 1
          %s360 = smul.addr %s359, 512
          %s361 = scalar_lea.vmem [#allocation4], %s360
          %s362 = smul.u32 16, %s18
          %s363 = smul.u32 4, %s19
          %s364 = smul.addr %s362, 8
          %s365 = sadd.s32 %s363, %s364
          %s366 = smul.addr %s365, 8
          %s367 = scalar_lea.vmem %s3, %s366
          // Predicated region
          $region52: #{_distance_matrices.2} parent=50 // pred_check
            _
          $region53: #{_distance_matrices.2} parent=50 // pred_check_branch
            %369 = sbr.rel (0) target = $region55
          $region54: #{_distance_matrices.2} parent=50 // pred_region
            // Predicated region
            $region56: #{_distance_matrices.2} parent=54 // pred_check
              _
            $region57: #{_distance_matrices.2} parent=54 // pred_check_branch
              %371 = sbr.rel (0) target = $region59
            $region58: #{_distance_matrices.2} parent=54 // pred_region
              loop: start=0, step=1, limit=1
              $region60: #{_distance_matrices.2} parent=58 // loop_pre_header
                _
              $region61: #{_distance_matrices.2} parent=58 // loop_header
                %s373 = sphi 0, %s377
                %p374 = scmp.ge.s32.totalorder %s373, 1
                %s378 = sphi %s367, %s367
                %s379 = sphi %s361, %s361
              $region62: #{_distance_matrices.2} parent=58 // loop_header_branch
                %376 = sbr.rel (%p374) target = $region66
              $region63: #{_distance_matrices.2} parent=58 // loop_body
                %v380 = vld [vmem:[%s378] sm:$0xff]
                %381 = vst [vmem:[%s379] sm:$0xff] %v380
                %v382 = vld [vmem:[%s378 + $0x8] sm:$0xff]
                %383 = vst [vmem:[%s379 + $0x8] sm:$0xff] %v382
                %v384 = vld [vmem:[%s378 + $0x10] sm:$0xff]
                %385 = vst [vmem:[%s379 + $0x10] sm:$0xff] %v384
                %v386 = vld [vmem:[%s378 + $0x18] sm:$0xff]
                %387 = vst [vmem:[%s379 + $0x18] sm:$0xff] %v386
                %v388 = vld [vmem:[%s378 + $0x40] sm:$0xff]
                %389 = vst [vmem:[%s379 + $0x20] sm:$0xff] %v388
                %v390 = vld [vmem:[%s378 + $0x48] sm:$0xff]
                %391 = vst [vmem:[%s379 + $0x28] sm:$0xff] %v390
                %v392 = vld [vmem:[%s378 + $0x50] sm:$0xff]
                %393 = vst [vmem:[%s379 + $0x30] sm:$0xff] %v392
                %v394 = vld [vmem:[%s378 + $0x58] sm:$0xff]
                %395 = vst [vmem:[%s379 + $0x38] sm:$0xff] %v394
                %v396 = vld [vmem:[%s378 + $0x80] sm:$0xff]
                %397 = vst [vmem:[%s379 + $0x40] sm:$0xff] %v396
                %v398 = vld [vmem:[%s378 + $0x88] sm:$0xff]
                %399 = vst [vmem:[%s379 + $0x48] sm:$0xff] %v398
                %v400 = vld [vmem:[%s378 + $0x90] sm:$0xff]
                %401 = vst [vmem:[%s379 + $0x50] sm:$0xff] %v400
                %v402 = vld [vmem:[%s378 + $0x98] sm:$0xff]
                %403 = vst [vmem:[%s379 + $0x58] sm:$0xff] %v402
                %v404 = vld [vmem:[%s378 + $0xc0] sm:$0xff]
                %405 = vst [vmem:[%s379 + $0x60] sm:$0xff] %v404
                %v406 = vld [vmem:[%s378 + $0xc8] sm:$0xff]
                %407 = vst [vmem:[%s379 + $0x68] sm:$0xff] %v406
                %v408 = vld [vmem:[%s378 + $0xd0] sm:$0xff]
                %409 = vst [vmem:[%s379 + $0x70] sm:$0xff] %v408
                %v410 = vld [vmem:[%s378 + $0xd8] sm:$0xff]
                %411 = vst [vmem:[%s379 + $0x78] sm:$0xff] %v410
                %v412 = vld [vmem:[%s378 + $0x100] sm:$0xff]
                %413 = vst [vmem:[%s379 + $0x80] sm:$0xff] %v412
                %v414 = vld [vmem:[%s378 + $0x108] sm:$0xff]
                %415 = vst [vmem:[%s379 + $0x88] sm:$0xff] %v414
                %v416 = vld [vmem:[%s378 + $0x110] sm:$0xff]
                %417 = vst [vmem:[%s379 + $0x90] sm:$0xff] %v416
                %v418 = vld [vmem:[%s378 + $0x118] sm:$0xff]
                %419 = vst [vmem:[%s379 + $0x98] sm:$0xff] %v418
                %v420 = vld [vmem:[%s378 + $0x140] sm:$0xff]
                %421 = vst [vmem:[%s379 + $0xa0] sm:$0xff] %v420
                %v422 = vld [vmem:[%s378 + $0x148] sm:$0xff]
                %423 = vst [vmem:[%s379 + $0xa8] sm:$0xff] %v422
                %v424 = vld [vmem:[%s378 + $0x150] sm:$0xff]
                %425 = vst [vmem:[%s379 + $0xb0] sm:$0xff] %v424
                %v426 = vld [vmem:[%s378 + $0x158] sm:$0xff]
                %427 = vst [vmem:[%s379 + $0xb8] sm:$0xff] %v426
                %v428 = vld [vmem:[%s378 + $0x180] sm:$0xff]
                %429 = vst [vmem:[%s379 + $0xc0] sm:$0xff] %v428
                %v430 = vld [vmem:[%s378 + $0x188] sm:$0xff]
                %431 = vst [vmem:[%s379 + $0xc8] sm:$0xff] %v430
                %v432 = vld [vmem:[%s378 + $0x190] sm:$0xff]
                %433 = vst [vmem:[%s379 + $0xd0] sm:$0xff] %v432
                %v434 = vld [vmem:[%s378 + $0x198] sm:$0xff]
                %435 = vst [vmem:[%s379 + $0xd8] sm:$0xff] %v434
                %v436 = vld [vmem:[%s378 + $0x1c0] sm:$0xff]
                %437 = vst [vmem:[%s379 + $0xe0] sm:$0xff] %v436
                %v438 = vld [vmem:[%s378 + $0x1c8] sm:$0xff]
                %439 = vst [vmem:[%s379 + $0xe8] sm:$0xff] %v438
                %v440 = vld [vmem:[%s378 + $0x1d0] sm:$0xff]
                %441 = vst [vmem:[%s379 + $0xf0] sm:$0xff] %v440
                %v442 = vld [vmem:[%s378 + $0x1d8] sm:$0xff]
                %443 = vst [vmem:[%s379 + $0xf8] sm:$0xff] %v442
                %v444 = vld [vmem:[%s378 + $0x200] sm:$0xff]
                %445 = vst [vmem:[%s379 + $0x100] sm:$0xff] %v444
                %v446 = vld [vmem:[%s378 + $0x208] sm:$0xff]
                %447 = vst [vmem:[%s379 + $0x108] sm:$0xff] %v446
                %v448 = vld [vmem:[%s378 + $0x210] sm:$0xff]
                %449 = vst [vmem:[%s379 + $0x110] sm:$0xff] %v448
                %v450 = vld [vmem:[%s378 + $0x218] sm:$0xff]
                %451 = vst [vmem:[%s379 + $0x118] sm:$0xff] %v450
                %v452 = vld [vmem:[%s378 + $0x240] sm:$0xff]
                %453 = vst [vmem:[%s379 + $0x120] sm:$0xff] %v452
                %v454 = vld [vmem:[%s378 + $0x248] sm:$0xff]
                %455 = vst [vmem:[%s379 + $0x128] sm:$0xff] %v454
                %v456 = vld [vmem:[%s378 + $0x250] sm:$0xff]
                %457 = vst [vmem:[%s379 + $0x130] sm:$0xff] %v456
                %v458 = vld [vmem:[%s378 + $0x258] sm:$0xff]
                %459 = vst [vmem:[%s379 + $0x138] sm:$0xff] %v458
                %v460 = vld [vmem:[%s378 + $0x280] sm:$0xff]
                %461 = vst [vmem:[%s379 + $0x140] sm:$0xff] %v460
                %v462 = vld [vmem:[%s378 + $0x288] sm:$0xff]
                %463 = vst [vmem:[%s379 + $0x148] sm:$0xff] %v462
                %v464 = vld [vmem:[%s378 + $0x290] sm:$0xff]
                %465 = vst [vmem:[%s379 + $0x150] sm:$0xff] %v464
                %v466 = vld [vmem:[%s378 + $0x298] sm:$0xff]
                %467 = vst [vmem:[%s379 + $0x158] sm:$0xff] %v466
                %v468 = vld [vmem:[%s378 + $0x2c0] sm:$0xff]
                %469 = vst [vmem:[%s379 + $0x160] sm:$0xff] %v468
                %v470 = vld [vmem:[%s378 + $0x2c8] sm:$0xff]
                %471 = vst [vmem:[%s379 + $0x168] sm:$0xff] %v470
                %v472 = vld [vmem:[%s378 + $0x2d0] sm:$0xff]
                %473 = vst [vmem:[%s379 + $0x170] sm:$0xff] %v472
                %v474 = vld [vmem:[%s378 + $0x2d8] sm:$0xff]
                %475 = vst [vmem:[%s379 + $0x178] sm:$0xff] %v474
                %v476 = vld [vmem:[%s378 + $0x300] sm:$0xff]
                %477 = vst [vmem:[%s379 + $0x180] sm:$0xff] %v476
                %v478 = vld [vmem:[%s378 + $0x308] sm:$0xff]
                %479 = vst [vmem:[%s379 + $0x188] sm:$0xff] %v478
                %v480 = vld [vmem:[%s378 + $0x310] sm:$0xff]
                %481 = vst [vmem:[%s379 + $0x190] sm:$0xff] %v480
                %v482 = vld [vmem:[%s378 + $0x318] sm:$0xff]
                %483 = vst [vmem:[%s379 + $0x198] sm:$0xff] %v482
                %v484 = vld [vmem:[%s378 + $0x340] sm:$0xff]
                %485 = vst [vmem:[%s379 + $0x1a0] sm:$0xff] %v484
                %v486 = vld [vmem:[%s378 + $0x348] sm:$0xff]
                %487 = vst [vmem:[%s379 + $0x1a8] sm:$0xff] %v486
                %v488 = vld [vmem:[%s378 + $0x350] sm:$0xff]
                %489 = vst [vmem:[%s379 + $0x1b0] sm:$0xff] %v488
                %v490 = vld [vmem:[%s378 + $0x358] sm:$0xff]
                %491 = vst [vmem:[%s379 + $0x1b8] sm:$0xff] %v490
                %v492 = vld [vmem:[%s378 + $0x380] sm:$0xff]
                %493 = vst [vmem:[%s379 + $0x1c0] sm:$0xff] %v492
                %v494 = vld [vmem:[%s378 + $0x388] sm:$0xff]
                %495 = vst [vmem:[%s379 + $0x1c8] sm:$0xff] %v494
                %v496 = vld [vmem:[%s378 + $0x390] sm:$0xff]
                %497 = vst [vmem:[%s379 + $0x1d0] sm:$0xff] %v496
                %v498 = vld [vmem:[%s378 + $0x398] sm:$0xff]
                %499 = vst [vmem:[%s379 + $0x1d8] sm:$0xff] %v498
                %v500 = vld [vmem:[%s378 + $0x3c0] sm:$0xff]
                %501 = vst [vmem:[%s379 + $0x1e0] sm:$0xff] %v500
                %v502 = vld [vmem:[%s378 + $0x3c8] sm:$0xff]
                %503 = vst [vmem:[%s379 + $0x1e8] sm:$0xff] %v502
                %v504 = vld [vmem:[%s378 + $0x3d0] sm:$0xff]
                %505 = vst [vmem:[%s379 + $0x1f0] sm:$0xff] %v504
                %v506 = vld [vmem:[%s378 + $0x3d8] sm:$0xff]
                %507 = vst [vmem:[%s379 + $0x1f8] sm:$0xff] %v506
              $region64: #{_distance_matrices.2} parent=58 // loop_footer
                %s377 = sadd.s32 1, %s373
              $region65: #{_distance_matrices.2} parent=58 // loop_footer_branch
                %372 = sbr.rel target = $region61
              $region66: #{_distance_matrices.2} parent=58 // loop_exit
                _
            $region59: #{_distance_matrices.2} parent=54 // pred_fallthru
              _
            // Predicated region
            $region67: #{_distance_matrices.2} parent=54 // pred_check
              _
            $region68: #{_distance_matrices.2} parent=54 // pred_check_branch
              %509 = sbr.rel target = $region70
            $region69: #{_distance_matrices.2} parent=54 // pred_region
              _
            $region70: #{_distance_matrices.2} parent=54 // pred_fallthru
              _
          $region55: #{_distance_matrices.2} parent=50 // pred_fallthru
            _
          %510 = vnop
        $region51: #{_distance_matrices.2} parent=23 // pred_fallthru
          _
      $region24: #{_distance_matrices.2} parent=5 // pred_fallthru
        _
      %p511 = scmp.le.s32.totalorder 1, %s10
      %p512 = scmp.lt.s32.totalorder %s10, 3
      %p513 = pnand %p511, %p512
      %p514 = pneg %p513
      // Predicated region
      $region71: #{_distance_matrices.2} parent=5 // pred_check
        _
      $region72: #{_distance_matrices.2} parent=5 // pred_check_branch
        %516 = sbr.rel (%p513) target = $region74
      $region73: #{_distance_matrices.2} parent=5 // pred_region
        %s517 = ssub.s32 %s10, 1
        %s518 = sand.u32 %s96, 1
        %s519 = sand.u32 %s96, 1
        %s520 = smul.addr %s519, 512
        %s521 = scalar_lea.vmem [#allocation3], %s520
        // Predicated region
        $region75: #{_distance_matrices.2} parent=73 // pred_check
          %p522 = pneg %p109
        $region76: #{_distance_matrices.2} parent=73 // pred_check_branch
          %524 = sbr.rel (%p522) target = $region78
        $region77: #{_distance_matrices.2} parent=73 // pred_region
          _
        $region78: #{_distance_matrices.2} parent=73 // pred_fallthru
          _
        %s525 = sand.u32 %s124, 1
        %s526 = sand.u32 %s124, 1
        %s527 = smul.addr %s526, 512
        %s528 = scalar_lea.vmem [#allocation4], %s527
        // Predicated region
        $region79: #{_distance_matrices.2} parent=73 // pred_check
          %p529 = pneg %p137
        $region80: #{_distance_matrices.2} parent=73 // pred_check_branch
          %531 = sbr.rel (%p529) target = $region82
        $region81: #{_distance_matrices.2} parent=73 // pred_region
          _
        $region82: #{_distance_matrices.2} parent=73 // pred_fallthru
          _
        %s532 = smul.u32 16, %s20
        %p533 = scmp.lt.s32.totalorder %s532, 15
        %s534 = scalar_select %p533, %s532, 15
        %s535 = smul.addr %s534, 8
        %s536 = scalar_lea.vmem %s0, %s535
        %p537 = pneg %p55
        %p538 = pneg %p52
        %p539 = scmp.lt.s32.totalorder %s21, 0
        %s540 = scalar_select %p539, %s21, 0
        %s541 = scalar_lea.vmem %s1, %s540
        %p542 = pneg %p81
        %p543 = pneg %p78
        %s544 = sand.u32 %s96, 1
        %s545 = sand.u32 %s96, 1
        %s546 = smul.addr %s545, 512
        %s547 = scalar_lea.vmem [#allocation3], %s546
        %p548 = pneg %p109
        %p549 = pneg %p106
        %s550 = sand.u32 %s124, 1
        %s551 = sand.u32 %s124, 1
        %s552 = smul.addr %s551, 512
        %s553 = scalar_lea.vmem [#allocation4], %s552
        %p554 = pneg %p137
        %p555 = pneg %p134
        %p556 = pneg %p165
        %p557 = pneg %p162
        %s558 = smul.u32 16, %s20
        %p559 = scmp.lt.s32.totalorder %s558, 15
        %s560 = scalar_select %p559, %s558, 15
        %p561 = scmp.lt.s32.totalorder %s21, 0
        %s562 = scalar_select %p561, %s21, 0
        %s563 = sadd.s32 %s562, %s560
        %s564 = smul.addr %s563, 8
        %s565 = scalar_lea.vmem %s4, %s564
        %s566 = smul.u32 16, %s20
        %p567 = scmp.lt.s32.totalorder %s566, 15
        %s568 = scalar_select %p567, %s566, 15
        %s569 = smul.addr %s568, 8
        %s570 = scalar_lea.vmem %s0, %s569
        %s571 = smul.u32 16, %s20
        %p572 = scmp.lt.s32.totalorder %s21, 0
        %s573 = scalar_select %p572, %s21, 0
        %s574 = scalar_lea.vmem %s1, %s573
        %s575 = smul.u32 16, %s20
        %s576 = smul.u32 4, %s22
        %s577 = smul.u32 16, %s21
        %s578 = smul.u32 4, %s22
        %s579 = smul.u32 16, %s20
        %p580 = scmp.lt.s32.totalorder %s579, 15
        %s581 = scalar_select %p580, %s579, 15
        %p582 = scmp.lt.s32.totalorder %s21, 0
        %s583 = scalar_select %p582, %s21, 0
        %s584 = sadd.s32 %s583, %s581
        %s585 = smul.addr %s584, 8
        %s586 = scalar_lea.vmem %s4, %s585
        %s587 = smul.u32 16, %s20
        %p588 = scmp.eq.s32.totalorder %s22, 0
        // Predicated region
        $region83: #{_distance_matrices.2} parent=73 // pred_check
          %p589 = pneg %p588
        $region84: #{_distance_matrices.2} parent=73 // pred_check_branch
          %591 = sbr.rel (%p589) target = $region86
        $region85: #{_distance_matrices.2} parent=73 // pred_region
          %592 = vst [vmem:[#allocation2] sm:$0xff] 0.0
          %593 = vst [vmem:[#allocation2 + $0x8] sm:$0xff] 0.0
          %594 = vst [vmem:[#allocation2 + $0x10] sm:$0xff] 0.0
          %595 = vst [vmem:[#allocation2 + $0x18] sm:$0xff] 0.0
          %596 = vst [vmem:[#allocation2 + $0x20] sm:$0xff] 0.0
          %597 = vst [vmem:[#allocation2 + $0x28] sm:$0xff] 0.0
          %598 = vst [vmem:[#allocation2 + $0x30] sm:$0xff] 0.0
          %599 = vst [vmem:[#allocation2 + $0x38] sm:$0xff] 0.0
          %600 = vst [vmem:[#allocation2 + $0x40] sm:$0xff] 0.0
          %601 = vst [vmem:[#allocation2 + $0x48] sm:$0xff] 0.0
          %602 = vst [vmem:[#allocation2 + $0x50] sm:$0xff] 0.0
          %603 = vst [vmem:[#allocation2 + $0x58] sm:$0xff] 0.0
          %604 = vst [vmem:[#allocation2 + $0x60] sm:$0xff] 0.0
          %605 = vst [vmem:[#allocation2 + $0x68] sm:$0xff] 0.0
          %606 = vst [vmem:[#allocation2 + $0x70] sm:$0xff] 0.0
          %607 = vst [vmem:[#allocation2 + $0x78] sm:$0xff] 0.0
        $region86: #{_distance_matrices.2} parent=73 // pred_fallthru
          _
        %v608 = vld [vmem:[#allocation2] sm:$0xff]
        %v609 = vld [vmem:[#allocation2 + $0x8] sm:$0xff]
        %v610 = vld [vmem:[#allocation2 + $0x10] sm:$0xff]
        %v611 = vld [vmem:[#allocation2 + $0x18] sm:$0xff]
        %v612 = vld [vmem:[#allocation2 + $0x20] sm:$0xff]
        %v613 = vld [vmem:[#allocation2 + $0x28] sm:$0xff]
        %v614 = vld [vmem:[#allocation2 + $0x30] sm:$0xff]
        %v615 = vld [vmem:[#allocation2 + $0x38] sm:$0xff]
        %v616 = vld [vmem:[#allocation2 + $0x40] sm:$0xff]
        %v617 = vld [vmem:[#allocation2 + $0x48] sm:$0xff]
        %v618 = vld [vmem:[#allocation2 + $0x50] sm:$0xff]
        %v619 = vld [vmem:[#allocation2 + $0x58] sm:$0xff]
        %v620 = vld [vmem:[#allocation2 + $0x60] sm:$0xff]
        %v621 = vld [vmem:[#allocation2 + $0x68] sm:$0xff]
        %v622 = vld [vmem:[#allocation2 + $0x70] sm:$0xff]
        %v623 = vld [vmem:[#allocation2 + $0x78] sm:$0xff]
        %v624 = vld [vmem:[%s521] sm:$0xff]
        %v625 = vld [vmem:[%s521 + $0x8] sm:$0xff]
        %v626 = vld [vmem:[%s521 + $0x10] sm:$0xff]
        %v627 = vld [vmem:[%s521 + $0x18] sm:$0xff]
        %v628 = vld [vmem:[%s521 + $0x20] sm:$0xff]
        %v629 = vld [vmem:[%s521 + $0x28] sm:$0xff]
        %v630 = vld [vmem:[%s521 + $0x30] sm:$0xff]
        %v631 = vld [vmem:[%s521 + $0x38] sm:$0xff]
        %v632 = vld [vmem:[%s521 + $0x40] sm:$0xff]
        %v633 = vld [vmem:[%s521 + $0x48] sm:$0xff]
        %v634 = vld [vmem:[%s521 + $0x50] sm:$0xff]
        %v635 = vld [vmem:[%s521 + $0x58] sm:$0xff]
        %v636 = vld [vmem:[%s521 + $0x60] sm:$0xff]
        %v637 = vld [vmem:[%s521 + $0x68] sm:$0xff]
        %v638 = vld [vmem:[%s521 + $0x70] sm:$0xff]
        %v639 = vld [vmem:[%s521 + $0x78] sm:$0xff]
        %v640 = vld [vmem:[%s521 + $0x80] sm:$0xff]
        %v641 = vld [vmem:[%s521 + $0x88] sm:$0xff]
        %v642 = vld [vmem:[%s521 + $0x90] sm:$0xff]
        %v643 = vld [vmem:[%s521 + $0x98] sm:$0xff]
        %v644 = vld [vmem:[%s521 + $0xa0] sm:$0xff]
        %v645 = vld [vmem:[%s521 + $0xa8] sm:$0xff]
        %v646 = vld [vmem:[%s521 + $0xb0] sm:$0xff]
        %v647 = vld [vmem:[%s521 + $0xb8] sm:$0xff]
        %v648 = vld [vmem:[%s521 + $0xc0] sm:$0xff]
        %v649 = vld [vmem:[%s521 + $0xc8] sm:$0xff]
        %v650 = vld [vmem:[%s521 + $0xd0] sm:$0xff]
        %v651 = vld [vmem:[%s521 + $0xd8] sm:$0xff]
        %v652 = vld [vmem:[%s521 + $0xe0] sm:$0xff]
        %v653 = vld [vmem:[%s521 + $0xe8] sm:$0xff]
        %v654 = vld [vmem:[%s521 + $0xf0] sm:$0xff]
        %v655 = vld [vmem:[%s521 + $0xf8] sm:$0xff]
        %v656 = vld [vmem:[%s521 + $0x100] sm:$0xff]
        %v657 = vld [vmem:[%s521 + $0x108] sm:$0xff]
        %v658 = vld [vmem:[%s521 + $0x110] sm:$0xff]
        %v659 = vld [vmem:[%s521 + $0x118] sm:$0xff]
        %v660 = vld [vmem:[%s521 + $0x120] sm:$0xff]
        %v661 = vld [vmem:[%s521 + $0x128] sm:$0xff]
        %v662 = vld [vmem:[%s521 + $0x130] sm:$0xff]
        %v663 = vld [vmem:[%s521 + $0x138] sm:$0xff]
        %v664 = vld [vmem:[%s521 + $0x140] sm:$0xff]
        %v665 = vld [vmem:[%s521 + $0x148] sm:$0xff]
        %v666 = vld [vmem:[%s521 + $0x150] sm:$0xff]
        %v667 = vld [vmem:[%s521 + $0x158] sm:$0xff]
        %v668 = vld [vmem:[%s521 + $0x160] sm:$0xff]
        %v669 = vld [vmem:[%s521 + $0x168] sm:$0xff]
        %v670 = vld [vmem:[%s521 + $0x170] sm:$0xff]
        %v671 = vld [vmem:[%s521 + $0x178] sm:$0xff]
        %v672 = vld [vmem:[%s521 + $0x180] sm:$0xff]
        %v673 = vld [vmem:[%s521 + $0x188] sm:$0xff]
        %v674 = vld [vmem:[%s521 + $0x190] sm:$0xff]
        %v675 = vld [vmem:[%s521 + $0x198] sm:$0xff]
        %v676 = vld [vmem:[%s521 + $0x1a0] sm:$0xff]
        %v677 = vld [vmem:[%s521 + $0x1a8] sm:$0xff]
        %v678 = vld [vmem:[%s521 + $0x1b0] sm:$0xff]
        %v679 = vld [vmem:[%s521 + $0x1b8] sm:$0xff]
        %v680 = vld [vmem:[%s521 + $0x1c0] sm:$0xff]
        %v681 = vld [vmem:[%s521 + $0x1c8] sm:$0xff]
        %v682 = vld [vmem:[%s521 + $0x1d0] sm:$0xff]
        %v683 = vld [vmem:[%s521 + $0x1d8] sm:$0xff]
        %v684 = vld [vmem:[%s521 + $0x1e0] sm:$0xff]
        %v685 = vld [vmem:[%s521 + $0x1e8] sm:$0xff]
        %v686 = vld [vmem:[%s521 + $0x1f0] sm:$0xff]
        %v687 = vld [vmem:[%s521 + $0x1f8] sm:$0xff]
        %v688 = vld [vmem:[%s528] sm:$0xff]
        %v689 = vld [vmem:[%s528 + $0x8] sm:$0xff]
        %v690 = vld [vmem:[%s528 + $0x10] sm:$0xff]
        %v691 = vld [vmem:[%s528 + $0x18] sm:$0xff]
        %v692 = vld [vmem:[%s528 + $0x20] sm:$0xff]
        %v693 = vld [vmem:[%s528 + $0x28] sm:$0xff]
        %v694 = vld [vmem:[%s528 + $0x30] sm:$0xff]
        %v695 = vld [vmem:[%s528 + $0x38] sm:$0xff]
        %v696 = vld [vmem:[%s528 + $0x40] sm:$0xff]
        %v697 = vld [vmem:[%s528 + $0x48] sm:$0xff]
        %v698 = vld [vmem:[%s528 + $0x50] sm:$0xff]
        %v699 = vld [vmem:[%s528 + $0x58] sm:$0xff]
        %v700 = vld [vmem:[%s528 + $0x60] sm:$0xff]
        %v701 = vld [vmem:[%s528 + $0x68] sm:$0xff]
        %v702 = vld [vmem:[%s528 + $0x70] sm:$0xff]
        %v703 = vld [vmem:[%s528 + $0x78] sm:$0xff]
        %v704 = vld [vmem:[%s528 + $0x80] sm:$0xff]
        %v705 = vld [vmem:[%s528 + $0x88] sm:$0xff]
        %v706 = vld [vmem:[%s528 + $0x90] sm:$0xff]
        %v707 = vld [vmem:[%s528 + $0x98] sm:$0xff]
        %v708 = vld [vmem:[%s528 + $0xa0] sm:$0xff]
        %v709 = vld [vmem:[%s528 + $0xa8] sm:$0xff]
        %v710 = vld [vmem:[%s528 + $0xb0] sm:$0xff]
        %v711 = vld [vmem:[%s528 + $0xb8] sm:$0xff]
        %v712 = vld [vmem:[%s528 + $0xc0] sm:$0xff]
        %v713 = vld [vmem:[%s528 + $0xc8] sm:$0xff]
        %v714 = vld [vmem:[%s528 + $0xd0] sm:$0xff]
        %v715 = vld [vmem:[%s528 + $0xd8] sm:$0xff]
        %v716 = vld [vmem:[%s528 + $0xe0] sm:$0xff]
        %v717 = vld [vmem:[%s528 + $0xe8] sm:$0xff]
        %v718 = vld [vmem:[%s528 + $0xf0] sm:$0xff]
        %v719 = vld [vmem:[%s528 + $0xf8] sm:$0xff]
        %v720 = vld [vmem:[%s528 + $0x100] sm:$0xff]
        %v721 = vld [vmem:[%s528 + $0x108] sm:$0xff]
        %v722 = vld [vmem:[%s528 + $0x110] sm:$0xff]
        %v723 = vld [vmem:[%s528 + $0x118] sm:$0xff]
        %v724 = vld [vmem:[%s528 + $0x120] sm:$0xff]
        %v725 = vld [vmem:[%s528 + $0x128] sm:$0xff]
        %v726 = vld [vmem:[%s528 + $0x130] sm:$0xff]
        %v727 = vld [vmem:[%s528 + $0x138] sm:$0xff]
        %v728 = vld [vmem:[%s528 + $0x140] sm:$0xff]
        %v729 = vld [vmem:[%s528 + $0x148] sm:$0xff]
        %v730 = vld [vmem:[%s528 + $0x150] sm:$0xff]
        %v731 = vld [vmem:[%s528 + $0x158] sm:$0xff]
        %v732 = vld [vmem:[%s528 + $0x160] sm:$0xff]
        %v733 = vld [vmem:[%s528 + $0x168] sm:$0xff]
        %v734 = vld [vmem:[%s528 + $0x170] sm:$0xff]
        %v735 = vld [vmem:[%s528 + $0x178] sm:$0xff]
        %v736 = vld [vmem:[%s528 + $0x180] sm:$0xff]
        %v737 = vld [vmem:[%s528 + $0x188] sm:$0xff]
        %v738 = vld [vmem:[%s528 + $0x190] sm:$0xff]
        %v739 = vld [vmem:[%s528 + $0x198] sm:$0xff]
        %v740 = vld [vmem:[%s528 + $0x1a0] sm:$0xff]
        %v741 = vld [vmem:[%s528 + $0x1a8] sm:$0xff]
        %v742 = vld [vmem:[%s528 + $0x1b0] sm:$0xff]
        %v743 = vld [vmem:[%s528 + $0x1b8] sm:$0xff]
        %v744 = vld [vmem:[%s528 + $0x1c0] sm:$0xff]
        %v745 = vld [vmem:[%s528 + $0x1c8] sm:$0xff]
        %v746 = vld [vmem:[%s528 + $0x1d0] sm:$0xff]
        %v747 = vld [vmem:[%s528 + $0x1d8] sm:$0xff]
        %v748 = vld [vmem:[%s528 + $0x1e0] sm:$0xff]
        %v749 = vld [vmem:[%s528 + $0x1e8] sm:$0xff]
        %v750 = vld [vmem:[%s528 + $0x1f0] sm:$0xff]
        %v751 = vld [vmem:[%s528 + $0x1f8] sm:$0xff]
        %752 = vmatpush.xpose.msra.mxu0 %v748
        %753 = vmatpush.xpose.msra.mxu0 %v744
        %754 = vmatpush.xpose.msra.mxu0 %v740
        %755 = vmatpush.xpose.msra.mxu0 %v736
        %756 = vmatpush.xpose.msra.mxu0 %v732
        %757 = vmatpush.xpose.msra.mxu0 %v728
        %758 = vmatpush.xpose.msra.mxu0 %v724
        %759 = vmatpush.xpose.msra.mxu0 %v720
        %760 = vmatpush.xpose.msra.mxu0 %v716
        %761 = vmatpush.xpose.msra.mxu0 %v712
        %762 = vmatpush.xpose.msra.mxu0 %v708
        %763 = vmatpush.xpose.msra.mxu0 %v704
        %764 = vmatpush.xpose.msra.mxu0 %v700
        %765 = vmatpush.xpose.msra.mxu0 %v696
        %766 = vmatpush.xpose.msra.mxu0 %v692
        %767 = vmatpush.xpose.msra.mxu0 %v688
        %768 = vmatmul.f32.gmra.mxu0 %v624
        %v769 = vpop.f32.mrf.mxu0
        %v770 = vadd.f32 0.0, %v769
        %771 = vmatmul.f32.gmra.mxu0 %v628
        %v772 = vpop.f32.mrf.mxu0
        %v773 = vadd.f32 0.0, %v772
        %774 = vmatmul.f32.gmra.mxu0 %v632
        %v775 = vpop.f32.mrf.mxu0
        %v776 = vadd.f32 0.0, %v775
        %777 = vmatmul.f32.gmra.mxu0 %v636
        %v778 = vpop.f32.mrf.mxu0
        %v779 = vadd.f32 0.0, %v778
        %780 = vmatmul.f32.gmra.mxu0 %v640
        %v781 = vpop.f32.mrf.mxu0
        %v782 = vadd.f32 0.0, %v781
        %783 = vmatmul.f32.gmra.mxu0 %v644
        %v784 = vpop.f32.mrf.mxu0
        %v785 = vadd.f32 0.0, %v784
        %786 = vmatmul.f32.gmra.mxu0 %v648
        %v787 = vpop.f32.mrf.mxu0
        %v788 = vadd.f32 0.0, %v787
        %789 = vmatmul.f32.gmra.mxu0 %v652
        %v790 = vpop.f32.mrf.mxu0
        %v791 = vadd.f32 0.0, %v790
        %792 = vmatmul.f32.gmra.mxu0 %v656
        %v793 = vpop.f32.mrf.mxu0
        %v794 = vadd.f32 0.0, %v793
        %795 = vmatmul.f32.gmra.mxu0 %v660
        %v796 = vpop.f32.mrf.mxu0
        %v797 = vadd.f32 0.0, %v796
        %798 = vmatmul.f32.gmra.mxu0 %v664
        %v799 = vpop.f32.mrf.mxu0
        %v800 = vadd.f32 0.0, %v799
        %801 = vmatmul.f32.gmra.mxu0 %v668
        %v802 = vpop.f32.mrf.mxu0
        %v803 = vadd.f32 0.0, %v802
        %804 = vmatmul.f32.gmra.mxu0 %v672
        %v805 = vpop.f32.mrf.mxu0
        %v806 = vadd.f32 0.0, %v805
        %807 = vmatmul.f32.gmra.mxu0 %v676
        %v808 = vpop.f32.mrf.mxu0
        %v809 = vadd.f32 0.0, %v808
        %810 = vmatmul.f32.gmra.mxu0 %v680
        %v811 = vpop.f32.mrf.mxu0
        %v812 = vadd.f32 0.0, %v811
        %813 = vmatmul.f32.gmra.mxu0 %v684
        %v814 = vpop.f32.mrf.mxu0
        %v815 = vadd.f32 0.0, %v814
        %816 = vdwg.mxu0
        %817 = vmatpush.xpose.msra.mxu0 %v749
        %818 = vmatpush.xpose.msra.mxu0 %v745
        %819 = vmatpush.xpose.msra.mxu0 %v741
        %820 = vmatpush.xpose.msra.mxu0 %v737
        %821 = vmatpush.xpose.msra.mxu0 %v733
        %822 = vmatpush.xpose.msra.mxu0 %v729
        %823 = vmatpush.xpose.msra.mxu0 %v725
        %824 = vmatpush.xpose.msra.mxu0 %v721
        %825 = vmatpush.xpose.msra.mxu0 %v717
        %826 = vmatpush.xpose.msra.mxu0 %v713
        %827 = vmatpush.xpose.msra.mxu0 %v709
        %828 = vmatpush.xpose.msra.mxu0 %v705
        %829 = vmatpush.xpose.msra.mxu0 %v701
        %830 = vmatpush.xpose.msra.mxu0 %v697
        %831 = vmatpush.xpose.msra.mxu0 %v693
        %832 = vmatpush.xpose.msra.mxu0 %v689
        %833 = vmatmul.f32.gmra.mxu0 %v625
        %v834 = vpop.f32.mrf.mxu0
        %v835 = vadd.f32 %v770, %v834
        %836 = vmatmul.f32.gmra.mxu0 %v629
        %v837 = vpop.f32.mrf.mxu0
        %v838 = vadd.f32 %v773, %v837
        %839 = vmatmul.f32.gmra.mxu0 %v633
        %v840 = vpop.f32.mrf.mxu0
        %v841 = vadd.f32 %v776, %v840
        %842 = vmatmul.f32.gmra.mxu0 %v637
        %v843 = vpop.f32.mrf.mxu0
        %v844 = vadd.f32 %v779, %v843
        %845 = vmatmul.f32.gmra.mxu0 %v641
        %v846 = vpop.f32.mrf.mxu0
        %v847 = vadd.f32 %v782, %v846
        %848 = vmatmul.f32.gmra.mxu0 %v645
        %v849 = vpop.f32.mrf.mxu0
        %v850 = vadd.f32 %v785, %v849
        %851 = vmatmul.f32.gmra.mxu0 %v649
        %v852 = vpop.f32.mrf.mxu0
        %v853 = vadd.f32 %v788, %v852
        %854 = vmatmul.f32.gmra.mxu0 %v653
        %v855 = vpop.f32.mrf.mxu0
        %v856 = vadd.f32 %v791, %v855
        %857 = vmatmul.f32.gmra.mxu0 %v657
        %v858 = vpop.f32.mrf.mxu0
        %v859 = vadd.f32 %v794, %v858
        %860 = vmatmul.f32.gmra.mxu0 %v661
        %v861 = vpop.f32.mrf.mxu0
        %v862 = vadd.f32 %v797, %v861
        %863 = vmatmul.f32.gmra.mxu0 %v665
        %v864 = vpop.f32.mrf.mxu0
        %v865 = vadd.f32 %v800, %v864
        %866 = vmatmul.f32.gmra.mxu0 %v669
        %v867 = vpop.f32.mrf.mxu0
        %v868 = vadd.f32 %v803, %v867
        %869 = vmatmul.f32.gmra.mxu0 %v673
        %v870 = vpop.f32.mrf.mxu0
        %v871 = vadd.f32 %v806, %v870
        %872 = vmatmul.f32.gmra.mxu0 %v677
        %v873 = vpop.f32.mrf.mxu0
        %v874 = vadd.f32 %v809, %v873
        %875 = vmatmul.f32.gmra.mxu0 %v681
        %v876 = vpop.f32.mrf.mxu0
        %v877 = vadd.f32 %v812, %v876
        %878 = vmatmul.f32.gmra.mxu0 %v685
        %v879 = vpop.f32.mrf.mxu0
        %v880 = vadd.f32 %v815, %v879
        %881 = vdwg.mxu0
        %882 = vmatpush.xpose.msra.mxu0 %v750
        %883 = vmatpush.xpose.msra.mxu0 %v746
        %884 = vmatpush.xpose.msra.mxu0 %v742
        %885 = vmatpush.xpose.msra.mxu0 %v738
        %886 = vmatpush.xpose.msra.mxu0 %v734
        %887 = vmatpush.xpose.msra.mxu0 %v730
        %888 = vmatpush.xpose.msra.mxu0 %v726
        %889 = vmatpush.xpose.msra.mxu0 %v722
        %890 = vmatpush.xpose.msra.mxu0 %v718
        %891 = vmatpush.xpose.msra.mxu0 %v714
        %892 = vmatpush.xpose.msra.mxu0 %v710
        %893 = vmatpush.xpose.msra.mxu0 %v706
        %894 = vmatpush.xpose.msra.mxu0 %v702
        %895 = vmatpush.xpose.msra.mxu0 %v698
        %896 = vmatpush.xpose.msra.mxu0 %v694
        %897 = vmatpush.xpose.msra.mxu0 %v690
        %898 = vmatmul.f32.gmra.mxu0 %v626
        %v899 = vpop.f32.mrf.mxu0
        %v900 = vadd.f32 %v835, %v899
        %901 = vmatmul.f32.gmra.mxu0 %v630
        %v902 = vpop.f32.mrf.mxu0
        %v903 = vadd.f32 %v838, %v902
        %904 = vmatmul.f32.gmra.mxu0 %v634
        %v905 = vpop.f32.mrf.mxu0
        %v906 = vadd.f32 %v841, %v905
        %907 = vmatmul.f32.gmra.mxu0 %v638
        %v908 = vpop.f32.mrf.mxu0
        %v909 = vadd.f32 %v844, %v908
        %910 = vmatmul.f32.gmra.mxu0 %v642
        %v911 = vpop.f32.mrf.mxu0
        %v912 = vadd.f32 %v847, %v911
        %913 = vmatmul.f32.gmra.mxu0 %v646
        %v914 = vpop.f32.mrf.mxu0
        %v915 = vadd.f32 %v850, %v914
        %916 = vmatmul.f32.gmra.mxu0 %v650
        %v917 = vpop.f32.mrf.mxu0
        %v918 = vadd.f32 %v853, %v917
        %919 = vmatmul.f32.gmra.mxu0 %v654
        %v920 = vpop.f32.mrf.mxu0
        %v921 = vadd.f32 %v856, %v920
        %922 = vmatmul.f32.gmra.mxu0 %v658
        %v923 = vpop.f32.mrf.mxu0
        %v924 = vadd.f32 %v859, %v923
        %925 = vmatmul.f32.gmra.mxu0 %v662
        %v926 = vpop.f32.mrf.mxu0
        %v927 = vadd.f32 %v862, %v926
        %928 = vmatmul.f32.gmra.mxu0 %v666
        %v929 = vpop.f32.mrf.mxu0
        %v930 = vadd.f32 %v865, %v929
        %931 = vmatmul.f32.gmra.mxu0 %v670
        %v932 = vpop.f32.mrf.mxu0
        %v933 = vadd.f32 %v868, %v932
        %934 = vmatmul.f32.gmra.mxu0 %v674
        %v935 = vpop.f32.mrf.mxu0
        %v936 = vadd.f32 %v871, %v935
        %937 = vmatmul.f32.gmra.mxu0 %v678
        %v938 = vpop.f32.mrf.mxu0
        %v939 = vadd.f32 %v874, %v938
        %940 = vmatmul.f32.gmra.mxu0 %v682
        %v941 = vpop.f32.mrf.mxu0
        %v942 = vadd.f32 %v877, %v941
        %943 = vmatmul.f32.gmra.mxu0 %v686
        %v944 = vpop.f32.mrf.mxu0
        %v945 = vadd.f32 %v880, %v944
        %946 = vdwg.mxu0
        %947 = vmatpush.xpose.msra.mxu0 %v751
        %948 = vmatpush.xpose.msra.mxu0 %v747
        %949 = vmatpush.xpose.msra.mxu0 %v743
        %950 = vmatpush.xpose.msra.mxu0 %v739
        %951 = vmatpush.xpose.msra.mxu0 %v735
        %952 = vmatpush.xpose.msra.mxu0 %v731
        %953 = vmatpush.xpose.msra.mxu0 %v727
        %954 = vmatpush.xpose.msra.mxu0 %v723
        %955 = vmatpush.xpose.msra.mxu0 %v719
        %956 = vmatpush.xpose.msra.mxu0 %v715
        %957 = vmatpush.xpose.msra.mxu0 %v711
        %958 = vmatpush.xpose.msra.mxu0 %v707
        %959 = vmatpush.xpose.msra.mxu0 %v703
        %960 = vmatpush.xpose.msra.mxu0 %v699
        %961 = vmatpush.xpose.msra.mxu0 %v695
        %962 = vmatpush.xpose.msra.mxu0 %v691
        %963 = vmatmul.f32.gmra.mxu0 %v627
        %v964 = vpop.f32.mrf.mxu0
        %v965 = vadd.f32 %v900, %v964
        %966 = vmatmul.f32.gmra.mxu0 %v631
        %v967 = vpop.f32.mrf.mxu0
        %v968 = vadd.f32 %v903, %v967
        %969 = vmatmul.f32.gmra.mxu0 %v635
        %v970 = vpop.f32.mrf.mxu0
        %v971 = vadd.f32 %v906, %v970
        %972 = vmatmul.f32.gmra.mxu0 %v639
        %v973 = vpop.f32.mrf.mxu0
        %v974 = vadd.f32 %v909, %v973
        %975 = vmatmul.f32.gmra.mxu0 %v643
        %v976 = vpop.f32.mrf.mxu0
        %v977 = vadd.f32 %v912, %v976
        %978 = vmatmul.f32.gmra.mxu0 %v647
        %v979 = vpop.f32.mrf.mxu0
        %v980 = vadd.f32 %v915, %v979
        %981 = vmatmul.f32.gmra.mxu0 %v651
        %v982 = vpop.f32.mrf.mxu0
        %v983 = vadd.f32 %v918, %v982
        %984 = vmatmul.f32.gmra.mxu0 %v655
        %v985 = vpop.f32.mrf.mxu0
        %v986 = vadd.f32 %v921, %v985
        %987 = vmatmul.f32.gmra.mxu0 %v659
        %v988 = vpop.f32.mrf.mxu0
        %v989 = vadd.f32 %v924, %v988
        %990 = vmatmul.f32.gmra.mxu0 %v663
        %v991 = vpop.f32.mrf.mxu0
        %v992 = vadd.f32 %v927, %v991
        %993 = vmatmul.f32.gmra.mxu0 %v667
        %v994 = vpop.f32.mrf.mxu0
        %v995 = vadd.f32 %v930, %v994
        %996 = vmatmul.f32.gmra.mxu0 %v671
        %v997 = vpop.f32.mrf.mxu0
        %v998 = vadd.f32 %v933, %v997
        %999 = vmatmul.f32.gmra.mxu0 %v675
        %v1000 = vpop.f32.mrf.mxu0
        %v1001 = vadd.f32 %v936, %v1000
        %1002 = vmatmul.f32.gmra.mxu0 %v679
        %v1003 = vpop.f32.mrf.mxu0
        %v1004 = vadd.f32 %v939, %v1003
        %1005 = vmatmul.f32.gmra.mxu0 %v683
        %v1006 = vpop.f32.mrf.mxu0
        %v1007 = vadd.f32 %v942, %v1006
        %1008 = vmatmul.f32.gmra.mxu0 %v687
        %v1009 = vpop.f32.mrf.mxu0
        %v1010 = vadd.f32 %v945, %v1009
        %1011 = vdwg.mxu0
        %v1012 = vadd.f32 %v608, %v965
        %v1013 = vadd.f32 %v609, %v968
        %v1014 = vadd.f32 %v610, %v971
        %v1015 = vadd.f32 %v611, %v974
        %v1016 = vadd.f32 %v612, %v977
        %v1017 = vadd.f32 %v613, %v980
        %v1018 = vadd.f32 %v614, %v983
        %v1019 = vadd.f32 %v615, %v986
        %v1020 = vadd.f32 %v616, %v989
        %v1021 = vadd.f32 %v617, %v992
        %v1022 = vadd.f32 %v618, %v995
        %v1023 = vadd.f32 %v619, %v998
        %v1024 = vadd.f32 %v620, %v1001
        %v1025 = vadd.f32 %v621, %v1004
        %v1026 = vadd.f32 %v622, %v1007
        %v1027 = vadd.f32 %v623, %v1010
        %1028 = vst [vmem:[#allocation2] sm:$0xff] %v1012
        %1029 = vst [vmem:[#allocation2 + $0x8] sm:$0xff] %v1013
        %1030 = vst [vmem:[#allocation2 + $0x10] sm:$0xff] %v1014
        %1031 = vst [vmem:[#allocation2 + $0x18] sm:$0xff] %v1015
        %1032 = vst [vmem:[#allocation2 + $0x20] sm:$0xff] %v1016
        %1033 = vst [vmem:[#allocation2 + $0x28] sm:$0xff] %v1017
        %1034 = vst [vmem:[#allocation2 + $0x30] sm:$0xff] %v1018
        %1035 = vst [vmem:[#allocation2 + $0x38] sm:$0xff] %v1019
        %1036 = vst [vmem:[#allocation2 + $0x40] sm:$0xff] %v1020
        %1037 = vst [vmem:[#allocation2 + $0x48] sm:$0xff] %v1021
        %1038 = vst [vmem:[#allocation2 + $0x50] sm:$0xff] %v1022
        %1039 = vst [vmem:[#allocation2 + $0x58] sm:$0xff] %v1023
        %1040 = vst [vmem:[#allocation2 + $0x60] sm:$0xff] %v1024
        %1041 = vst [vmem:[#allocation2 + $0x68] sm:$0xff] %v1025
        %1042 = vst [vmem:[#allocation2 + $0x70] sm:$0xff] %v1026
        %1043 = vst [vmem:[#allocation2 + $0x78] sm:$0xff] %v1027
        %p1044 = scmp.eq.s32.totalorder %s22, 1
        // Predicated region
        $region87: #{_distance_matrices.2} parent=73 // pred_check
          %p1045 = pneg %p1044
        $region88: #{_distance_matrices.2} parent=73 // pred_check_branch
          %1047 = sbr.rel (%p1045) target = $region90
        $region89: #{_distance_matrices.2} parent=73 // pred_region
          %v1048 = vld [vmem:[%s570] sm:$0xff]
          %v1049 = vld [vmem:[%s570 + $0x8] sm:$0xff]
          %v1050 = vld [vmem:[%s570 + $0x10] sm:$0xff]
          %v1051 = vld [vmem:[%s570 + $0x18] sm:$0xff]
          %v1052 = vld [vmem:[%s570 + $0x20] sm:$0xff]
          %v1053 = vld [vmem:[%s570 + $0x28] sm:$0xff]
          %v1054 = vld [vmem:[%s570 + $0x30] sm:$0xff]
          %v1055 = vld [vmem:[%s570 + $0x38] sm:$0xff]
          %v1056 = vld [vmem:[%s570 + $0x40] sm:$0xff]
          %v1057 = vld [vmem:[%s570 + $0x48] sm:$0xff]
          %v1058 = vld [vmem:[%s570 + $0x50] sm:$0xff]
          %v1059 = vld [vmem:[%s570 + $0x58] sm:$0xff]
          %v1060 = vld [vmem:[%s570 + $0x60] sm:$0xff]
          %v1061 = vld [vmem:[%s570 + $0x68] sm:$0xff]
          %v1062 = vld [vmem:[%s570 + $0x70] sm:$0xff]
          %v1063 = vld [vmem:[%s570 + $0x78] sm:$0xff]
          %v1064 = vld [vmem:[%s574] sm:$0x1]
          %1066 = vset.pattern.permute.xlu0 0
          %1067 = vperm.xlu0 %1066, %v1048
          %v1068 = vpop.permute.xlu0 %1067
          %1071 = vset.pattern.permute.xlu0 0
          %1072 = vperm.xlu0 %1071, %v1049
          %v1073 = vpop.permute.xlu0 %1072
          %1076 = vset.pattern.permute.xlu0 0
          %1077 = vperm.xlu0 %1076, %v1050
          %v1078 = vpop.permute.xlu0 %1077
          %1081 = vset.pattern.permute.xlu0 0
          %1082 = vperm.xlu0 %1081, %v1051
          %v1083 = vpop.permute.xlu0 %1082
          %1086 = vset.pattern.permute.xlu0 0
          %1087 = vperm.xlu0 %1086, %v1052
          %v1088 = vpop.permute.xlu0 %1087
          %1091 = vset.pattern.permute.xlu0 0
          %1092 = vperm.xlu0 %1091, %v1053
          %v1093 = vpop.permute.xlu0 %1092
          %1096 = vset.pattern.permute.xlu0 0
          %1097 = vperm.xlu0 %1096, %v1054
          %v1098 = vpop.permute.xlu0 %1097
          %1101 = vset.pattern.permute.xlu0 0
          %1102 = vperm.xlu0 %1101, %v1055
          %v1103 = vpop.permute.xlu0 %1102
          %1106 = vset.pattern.permute.xlu0 0
          %1107 = vperm.xlu0 %1106, %v1056
          %v1108 = vpop.permute.xlu0 %1107
          %1111 = vset.pattern.permute.xlu0 0
          %1112 = vperm.xlu0 %1111, %v1057
          %v1113 = vpop.permute.xlu0 %1112
          %1116 = vset.pattern.permute.xlu0 0
          %1117 = vperm.xlu0 %1116, %v1058
          %v1118 = vpop.permute.xlu0 %1117
          %1121 = vset.pattern.permute.xlu0 0
          %1122 = vperm.xlu0 %1121, %v1059
          %v1123 = vpop.permute.xlu0 %1122
          %1126 = vset.pattern.permute.xlu0 0
          %1127 = vperm.xlu0 %1126, %v1060
          %v1128 = vpop.permute.xlu0 %1127
          %1131 = vset.pattern.permute.xlu0 0
          %1132 = vperm.xlu0 %1131, %v1061
          %v1133 = vpop.permute.xlu0 %1132
          %1136 = vset.pattern.permute.xlu0 0
          %1137 = vperm.xlu0 %1136, %v1062
          %v1138 = vpop.permute.xlu0 %1137
          %1141 = vset.pattern.permute.xlu0 0
          %1142 = vperm.xlu0 %1141, %v1063
          %v1143 = vpop.permute.xlu0 %1142
          %v1146 = vperm.slane %v1064, 0
          %v1148 = vadd.f32 %v1068, %v1146
          %v1149 = vadd.f32 %v1073, %v1146
          %v1150 = vadd.f32 %v1078, %v1146
          %v1151 = vadd.f32 %v1083, %v1146
          %v1152 = vadd.f32 %v1088, %v1146
          %v1153 = vadd.f32 %v1093, %v1146
          %v1154 = vadd.f32 %v1098, %v1146
          %v1155 = vadd.f32 %v1103, %v1146
          %v1156 = vadd.f32 %v1108, %v1146
          %v1157 = vadd.f32 %v1113, %v1146
          %v1158 = vadd.f32 %v1118, %v1146
          %v1159 = vadd.f32 %v1123, %v1146
          %v1160 = vadd.f32 %v1128, %v1146
          %v1161 = vadd.f32 %v1133, %v1146
          %v1162 = vadd.f32 %v1138, %v1146
          %v1163 = vadd.f32 %v1143, %v1146
          %v1164 = vld [vmem:[#allocation2] sm:$0xff]
          %v1165 = vld [vmem:[#allocation2 + $0x8] sm:$0xff]
          %v1166 = vld [vmem:[#allocation2 + $0x10] sm:$0xff]
          %v1167 = vld [vmem:[#allocation2 + $0x18] sm:$0xff]
          %v1168 = vld [vmem:[#allocation2 + $0x20] sm:$0xff]
          %v1169 = vld [vmem:[#allocation2 + $0x28] sm:$0xff]
          %v1170 = vld [vmem:[#allocation2 + $0x30] sm:$0xff]
          %v1171 = vld [vmem:[#allocation2 + $0x38] sm:$0xff]
          %v1172 = vld [vmem:[#allocation2 + $0x40] sm:$0xff]
          %v1173 = vld [vmem:[#allocation2 + $0x48] sm:$0xff]
          %v1174 = vld [vmem:[#allocation2 + $0x50] sm:$0xff]
          %v1175 = vld [vmem:[#allocation2 + $0x58] sm:$0xff]
          %v1176 = vld [vmem:[#allocation2 + $0x60] sm:$0xff]
          %v1177 = vld [vmem:[#allocation2 + $0x68] sm:$0xff]
          %v1178 = vld [vmem:[#allocation2 + $0x70] sm:$0xff]
          %v1179 = vld [vmem:[#allocation2 + $0x78] sm:$0xff]
          %v1180 = vmul.f32 %v1164, 2.0
          %v1181 = vmul.f32 %v1165, 2.0
          %v1182 = vmul.f32 %v1166, 2.0
          %v1183 = vmul.f32 %v1167, 2.0
          %v1184 = vmul.f32 %v1168, 2.0
          %v1185 = vmul.f32 %v1169, 2.0
          %v1186 = vmul.f32 %v1170, 2.0
          %v1187 = vmul.f32 %v1171, 2.0
          %v1188 = vmul.f32 %v1172, 2.0
          %v1189 = vmul.f32 %v1173, 2.0
          %v1190 = vmul.f32 %v1174, 2.0
          %v1191 = vmul.f32 %v1175, 2.0
          %v1192 = vmul.f32 %v1176, 2.0
          %v1193 = vmul.f32 %v1177, 2.0
          %v1194 = vmul.f32 %v1178, 2.0
          %v1195 = vmul.f32 %v1179, 2.0
          %v1196 = vsub.f32 %v1148, %v1180
          %v1197 = vsub.f32 %v1149, %v1181
          %v1198 = vsub.f32 %v1150, %v1182
          %v1199 = vsub.f32 %v1151, %v1183
          %v1200 = vsub.f32 %v1152, %v1184
          %v1201 = vsub.f32 %v1153, %v1185
          %v1202 = vsub.f32 %v1154, %v1186
          %v1203 = vsub.f32 %v1155, %v1187
          %v1204 = vsub.f32 %v1156, %v1188
          %v1205 = vsub.f32 %v1157, %v1189
          %v1206 = vsub.f32 %v1158, %v1190
          %v1207 = vsub.f32 %v1159, %v1191
          %v1208 = vsub.f32 %v1160, %v1192
          %v1209 = vsub.f32 %v1161, %v1193
          %v1210 = vsub.f32 %v1162, %v1194
          %v1211 = vsub.f32 %v1163, %v1195
          %v1212 = vmax.f32 %v1196, 0.0
          %v1213 = vmax.f32 %v1197, 0.0
          %v1214 = vmax.f32 %v1198, 0.0
          %v1215 = vmax.f32 %v1199, 0.0
          %v1216 = vmax.f32 %v1200, 0.0
          %v1217 = vmax.f32 %v1201, 0.0
          %v1218 = vmax.f32 %v1202, 0.0
          %v1219 = vmax.f32 %v1203, 0.0
          %v1220 = vmax.f32 %v1204, 0.0
          %v1221 = vmax.f32 %v1205, 0.0
          %v1222 = vmax.f32 %v1206, 0.0
          %v1223 = vmax.f32 %v1207, 0.0
          %v1224 = vmax.f32 %v1208, 0.0
          %v1225 = vmax.f32 %v1209, 0.0
          %v1226 = vmax.f32 %v1210, 0.0
          %v1227 = vmax.f32 %v1211, 0.0
          %v1228 = vrsqrt.pop %v1212
          %v1229 = vmul.f32 %v1228, %v1212
          %v1230 = vmul.f32 %v1229, %v1228
          %v1231 = vmul.f32 0.5, %v1230
          %v1232 = vsub.f32 1.5, %v1231
          %v1233 = vmul.f32 %v1228, %v1232
          %v1234 = vmul.f32 %v1212, %v1233
          %vm1235 = vcmp.eq.f32.partialorder %v1212, inf
          %v1236 = vsel %vm1235, %v1212, %v1234
          %vm1237 = vcmp.eq.f32.partialorder %v1212, 0.0
          %v1238 = vand.u32 %v1212, 2147483648
          %v1239 = vsel %vm1237, %v1238, %v1236
          %v1240 = vrsqrt.pop %v1213
          %v1241 = vmul.f32 %v1240, %v1213
          %v1242 = vmul.f32 %v1241, %v1240
          %v1243 = vmul.f32 0.5, %v1242
          %v1244 = vsub.f32 1.5, %v1243
          %v1245 = vmul.f32 %v1240, %v1244
          %v1246 = vmul.f32 %v1213, %v1245
          %vm1247 = vcmp.eq.f32.partialorder %v1213, inf
          %v1248 = vsel %vm1247, %v1213, %v1246
          %vm1249 = vcmp.eq.f32.partialorder %v1213, 0.0
          %v1250 = vand.u32 %v1213, 2147483648
          %v1251 = vsel %vm1249, %v1250, %v1248
          %v1252 = vrsqrt.pop %v1214
          %v1253 = vmul.f32 %v1252, %v1214
          %v1254 = vmul.f32 %v1253, %v1252
          %v1255 = vmul.f32 0.5, %v1254
          %v1256 = vsub.f32 1.5, %v1255
          %v1257 = vmul.f32 %v1252, %v1256
          %v1258 = vmul.f32 %v1214, %v1257
          %vm1259 = vcmp.eq.f32.partialorder %v1214, inf
          %v1260 = vsel %vm1259, %v1214, %v1258
          %vm1261 = vcmp.eq.f32.partialorder %v1214, 0.0
          %v1262 = vand.u32 %v1214, 2147483648
          %v1263 = vsel %vm1261, %v1262, %v1260
          %v1264 = vrsqrt.pop %v1215
          %v1265 = vmul.f32 %v1264, %v1215
          %v1266 = vmul.f32 %v1265, %v1264
          %v1267 = vmul.f32 0.5, %v1266
          %v1268 = vsub.f32 1.5, %v1267
          %v1269 = vmul.f32 %v1264, %v1268
          %v1270 = vmul.f32 %v1215, %v1269
          %vm1271 = vcmp.eq.f32.partialorder %v1215, inf
          %v1272 = vsel %vm1271, %v1215, %v1270
          %vm1273 = vcmp.eq.f32.partialorder %v1215, 0.0
          %v1274 = vand.u32 %v1215, 2147483648
          %v1275 = vsel %vm1273, %v1274, %v1272
          %v1276 = vrsqrt.pop %v1216
          %v1277 = vmul.f32 %v1276, %v1216
          %v1278 = vmul.f32 %v1277, %v1276
          %v1279 = vmul.f32 0.5, %v1278
          %v1280 = vsub.f32 1.5, %v1279
          %v1281 = vmul.f32 %v1276, %v1280
          %v1282 = vmul.f32 %v1216, %v1281
          %vm1283 = vcmp.eq.f32.partialorder %v1216, inf
          %v1284 = vsel %vm1283, %v1216, %v1282
          %vm1285 = vcmp.eq.f32.partialorder %v1216, 0.0
          %v1286 = vand.u32 %v1216, 2147483648
          %v1287 = vsel %vm1285, %v1286, %v1284
          %v1288 = vrsqrt.pop %v1217
          %v1289 = vmul.f32 %v1288, %v1217
          %v1290 = vmul.f32 %v1289, %v1288
          %v1291 = vmul.f32 0.5, %v1290
          %v1292 = vsub.f32 1.5, %v1291
          %v1293 = vmul.f32 %v1288, %v1292
          %v1294 = vmul.f32 %v1217, %v1293
          %vm1295 = vcmp.eq.f32.partialorder %v1217, inf
          %v1296 = vsel %vm1295, %v1217, %v1294
          %vm1297 = vcmp.eq.f32.partialorder %v1217, 0.0
          %v1298 = vand.u32 %v1217, 2147483648
          %v1299 = vsel %vm1297, %v1298, %v1296
          %v1300 = vrsqrt.pop %v1218
          %v1301 = vmul.f32 %v1300, %v1218
          %v1302 = vmul.f32 %v1301, %v1300
          %v1303 = vmul.f32 0.5, %v1302
          %v1304 = vsub.f32 1.5, %v1303
          %v1305 = vmul.f32 %v1300, %v1304
          %v1306 = vmul.f32 %v1218, %v1305
          %vm1307 = vcmp.eq.f32.partialorder %v1218, inf
          %v1308 = vsel %vm1307, %v1218, %v1306
          %vm1309 = vcmp.eq.f32.partialorder %v1218, 0.0
          %v1310 = vand.u32 %v1218, 2147483648
          %v1311 = vsel %vm1309, %v1310, %v1308
          %v1312 = vrsqrt.pop %v1219
          %v1313 = vmul.f32 %v1312, %v1219
          %v1314 = vmul.f32 %v1313, %v1312
          %v1315 = vmul.f32 0.5, %v1314
          %v1316 = vsub.f32 1.5, %v1315
          %v1317 = vmul.f32 %v1312, %v1316
          %v1318 = vmul.f32 %v1219, %v1317
          %vm1319 = vcmp.eq.f32.partialorder %v1219, inf
          %v1320 = vsel %vm1319, %v1219, %v1318
          %vm1321 = vcmp.eq.f32.partialorder %v1219, 0.0
          %v1322 = vand.u32 %v1219, 2147483648
          %v1323 = vsel %vm1321, %v1322, %v1320
          %v1324 = vrsqrt.pop %v1220
          %v1325 = vmul.f32 %v1324, %v1220
          %v1326 = vmul.f32 %v1325, %v1324
          %v1327 = vmul.f32 0.5, %v1326
          %v1328 = vsub.f32 1.5, %v1327
          %v1329 = vmul.f32 %v1324, %v1328
          %v1330 = vmul.f32 %v1220, %v1329
          %vm1331 = vcmp.eq.f32.partialorder %v1220, inf
          %v1332 = vsel %vm1331, %v1220, %v1330
          %vm1333 = vcmp.eq.f32.partialorder %v1220, 0.0
          %v1334 = vand.u32 %v1220, 2147483648
          %v1335 = vsel %vm1333, %v1334, %v1332
          %v1336 = vrsqrt.pop %v1221
          %v1337 = vmul.f32 %v1336, %v1221
          %v1338 = vmul.f32 %v1337, %v1336
          %v1339 = vmul.f32 0.5, %v1338
          %v1340 = vsub.f32 1.5, %v1339
          %v1341 = vmul.f32 %v1336, %v1340
          %v1342 = vmul.f32 %v1221, %v1341
          %vm1343 = vcmp.eq.f32.partialorder %v1221, inf
          %v1344 = vsel %vm1343, %v1221, %v1342
          %vm1345 = vcmp.eq.f32.partialorder %v1221, 0.0
          %v1346 = vand.u32 %v1221, 2147483648
          %v1347 = vsel %vm1345, %v1346, %v1344
          %v1348 = vrsqrt.pop %v1222
          %v1349 = vmul.f32 %v1348, %v1222
          %v1350 = vmul.f32 %v1349, %v1348
          %v1351 = vmul.f32 0.5, %v1350
          %v1352 = vsub.f32 1.5, %v1351
          %v1353 = vmul.f32 %v1348, %v1352
          %v1354 = vmul.f32 %v1222, %v1353
          %vm1355 = vcmp.eq.f32.partialorder %v1222, inf
          %v1356 = vsel %vm1355, %v1222, %v1354
          %vm1357 = vcmp.eq.f32.partialorder %v1222, 0.0
          %v1358 = vand.u32 %v1222, 2147483648
          %v1359 = vsel %vm1357, %v1358, %v1356
          %v1360 = vrsqrt.pop %v1223
          %v1361 = vmul.f32 %v1360, %v1223
          %v1362 = vmul.f32 %v1361, %v1360
          %v1363 = vmul.f32 0.5, %v1362
          %v1364 = vsub.f32 1.5, %v1363
          %v1365 = vmul.f32 %v1360, %v1364
          %v1366 = vmul.f32 %v1223, %v1365
          %vm1367 = vcmp.eq.f32.partialorder %v1223, inf
          %v1368 = vsel %vm1367, %v1223, %v1366
          %vm1369 = vcmp.eq.f32.partialorder %v1223, 0.0
          %v1370 = vand.u32 %v1223, 2147483648
          %v1371 = vsel %vm1369, %v1370, %v1368
          %v1372 = vrsqrt.pop %v1224
          %v1373 = vmul.f32 %v1372, %v1224
          %v1374 = vmul.f32 %v1373, %v1372
          %v1375 = vmul.f32 0.5, %v1374
          %v1376 = vsub.f32 1.5, %v1375
          %v1377 = vmul.f32 %v1372, %v1376
          %v1378 = vmul.f32 %v1224, %v1377
          %vm1379 = vcmp.eq.f32.partialorder %v1224, inf
          %v1380 = vsel %vm1379, %v1224, %v1378
          %vm1381 = vcmp.eq.f32.partialorder %v1224, 0.0
          %v1382 = vand.u32 %v1224, 2147483648
          %v1383 = vsel %vm1381, %v1382, %v1380
          %v1384 = vrsqrt.pop %v1225
          %v1385 = vmul.f32 %v1384, %v1225
          %v1386 = vmul.f32 %v1385, %v1384
          %v1387 = vmul.f32 0.5, %v1386
          %v1388 = vsub.f32 1.5, %v1387
          %v1389 = vmul.f32 %v1384, %v1388
          %v1390 = vmul.f32 %v1225, %v1389
          %vm1391 = vcmp.eq.f32.partialorder %v1225, inf
          %v1392 = vsel %vm1391, %v1225, %v1390
          %vm1393 = vcmp.eq.f32.partialorder %v1225, 0.0
          %v1394 = vand.u32 %v1225, 2147483648
          %v1395 = vsel %vm1393, %v1394, %v1392
          %v1396 = vrsqrt.pop %v1226
          %v1397 = vmul.f32 %v1396, %v1226
          %v1398 = vmul.f32 %v1397, %v1396
          %v1399 = vmul.f32 0.5, %v1398
          %v1400 = vsub.f32 1.5, %v1399
          %v1401 = vmul.f32 %v1396, %v1400
          %v1402 = vmul.f32 %v1226, %v1401
          %vm1403 = vcmp.eq.f32.partialorder %v1226, inf
          %v1404 = vsel %vm1403, %v1226, %v1402
          %vm1405 = vcmp.eq.f32.partialorder %v1226, 0.0
          %v1406 = vand.u32 %v1226, 2147483648
          %v1407 = vsel %vm1405, %v1406, %v1404
          %v1408 = vrsqrt.pop %v1227
          %v1409 = vmul.f32 %v1408, %v1227
          %v1410 = vmul.f32 %v1409, %v1408
          %v1411 = vmul.f32 0.5, %v1410
          %v1412 = vsub.f32 1.5, %v1411
          %v1413 = vmul.f32 %v1408, %v1412
          %v1414 = vmul.f32 %v1227, %v1413
          %vm1415 = vcmp.eq.f32.partialorder %v1227, inf
          %v1416 = vsel %vm1415, %v1227, %v1414
          %vm1417 = vcmp.eq.f32.partialorder %v1227, 0.0
          %v1418 = vand.u32 %v1227, 2147483648
          %v1419 = vsel %vm1417, %v1418, %v1416
          %v1420 = vmul.f32 %v1239, 0.015625
          %v1421 = vmul.f32 %v1251, 0.015625
          %v1422 = vmul.f32 %v1263, 0.015625
          %v1423 = vmul.f32 %v1275, 0.015625
          %v1424 = vmul.f32 %v1287, 0.015625
          %v1425 = vmul.f32 %v1299, 0.015625
          %v1426 = vmul.f32 %v1311, 0.015625
          %v1427 = vmul.f32 %v1323, 0.015625
          %v1428 = vmul.f32 %v1335, 0.015625
          %v1429 = vmul.f32 %v1347, 0.015625
          %v1430 = vmul.f32 %v1359, 0.015625
          %v1431 = vmul.f32 %v1371, 0.015625
          %v1432 = vmul.f32 %v1383, 0.015625
          %v1433 = vmul.f32 %v1395, 0.015625
          %v1434 = vmul.f32 %v1407, 0.015625
          %v1435 = vmul.f32 %v1419, 0.015625
          %1436 = vst [vmem:[%s586] sm:$0xff] %v1420
          %1437 = vst [vmem:[%s586 + $0x8] sm:$0xff] %v1421
          %1438 = vst [vmem:[%s586 + $0x10] sm:$0xff] %v1422
          %1439 = vst [vmem:[%s586 + $0x18] sm:$0xff] %v1423
          %1440 = vst [vmem:[%s586 + $0x20] sm:$0xff] %v1424
          %1441 = vst [vmem:[%s586 + $0x28] sm:$0xff] %v1425
          %1442 = vst [vmem:[%s586 + $0x30] sm:$0xff] %v1426
          %1443 = vst [vmem:[%s586 + $0x38] sm:$0xff] %v1427
          %1444 = vst [vmem:[%s586 + $0x40] sm:$0xff] %v1428
          %1445 = vst [vmem:[%s586 + $0x48] sm:$0xff] %v1429
          %1446 = vst [vmem:[%s586 + $0x50] sm:$0xff] %v1430
          %1447 = vst [vmem:[%s586 + $0x58] sm:$0xff] %v1431
          %1448 = vst [vmem:[%s586 + $0x60] sm:$0xff] %v1432
          %1449 = vst [vmem:[%s586 + $0x68] sm:$0xff] %v1433
          %1450 = vst [vmem:[%s586 + $0x70] sm:$0xff] %v1434
          %1451 = vst [vmem:[%s586 + $0x78] sm:$0xff] %v1435
        $region90: #{_distance_matrices.2} parent=73 // pred_fallthru
          _
        %s1452 = smul.u32 16, %s20
        %p1453 = scmp.lt.s32.totalorder %s1452, 15
        %s1454 = scalar_select %p1453, %s1452, 15
        %p1455 = scmp.lt.s32.totalorder %s21, 0
        %s1456 = scalar_select %p1455, %s21, 0
        %s1457 = sadd.s32 %s1456, %s1454
        %s1458 = smul.addr %s1457, 8
        %s1459 = scalar_lea.vmem %s4, %s1458
        // Predicated region
        $region91: #{_distance_matrices.2} parent=73 // pred_check
          %p1460 = pneg %p162
        $region92: #{_distance_matrices.2} parent=73 // pred_check_branch
          %1462 = sbr.rel (%p1460) target = $region94
        $region93: #{_distance_matrices.2} parent=73 // pred_region
          %s1463 = smul.u32 16, %s20
        $region94: #{_distance_matrices.2} parent=73 // pred_fallthru
          _
        // Predicated region
        $region95: #{_distance_matrices.2} parent=73 // pred_check
          %p1464 = pneg %p162
        $region96: #{_distance_matrices.2} parent=73 // pred_check_branch
          %1466 = sbr.rel (%p1464) target = $region98
        $region97: #{_distance_matrices.2} parent=73 // pred_region
          %s1467 = smul.u32 16, %s20
          %p1468 = scmp.lt.s32.totalorder %s1467, 15
          %s1469 = scalar_select %p1468, %s1467, 15
          %p1470 = scmp.lt.s32.totalorder %s21, 0
          %s1471 = scalar_select %p1470, %s21, 0
          %s1472 = sadd.s32 %s1471, %s1469
          %s1473 = smul.addr %s1472, 8
          %s1474 = scalar_lea.vmem %s4, %s1473
        $region98: #{_distance_matrices.2} parent=73 // pred_fallthru
          _
      $region74: #{_distance_matrices.2} parent=5 // pred_fallthru
        _
      %p1475 = scmp.le.s32.totalorder 2, %s10
      // Predicated region
      $region99: #{_distance_matrices.2} parent=5 // pred_check
        %p1476 = pneg %p1475
      $region100: #{_distance_matrices.2} parent=5 // pred_check_branch
        %1478 = sbr.rel (%p1476) target = $region102
      $region101: #{_distance_matrices.2} parent=5 // pred_region
        %s1479 = ssub.s32 %s10, 2
      $region102: #{_distance_matrices.2} parent=5 // pred_fallthru
        _
    $region6: #{_distance_matrices.2} parent=1 // loop_footer
      %s14 = sadd.s32 1, %s10
    $region7: #{_distance_matrices.2} parent=1 // loop_footer_branch
      %9 = sbr.rel target = $region3
    $region8: #{_distance_matrices.2} parent=1 // loop_exit
      _

</llo_original>
